<compile_context>
chip_gen: v7x
topology: tpu7x:2x2x1
jax: 0.10.0
libtpu: 0.0.40
codegen_flags: <defaults>
</compile_context>

<pallas_src>
import functools

import jax
import jax.numpy as jnp
from jax.experimental import pallas as pl
from jax.experimental.pallas import tpu as pltpu


# ---------------------------------------------------------------------------
# Kernel 1: fused gated projections, head-major output (tiled over (batch, row-block)).
# ---------------------------------------------------------------------------
def _gated_proj_kernel(q_ref, k_ref, v_ref, sup_ref,
                       wq_ref, wk_ref, wv_ref, h_all_ref,
                       qp_ref, kp_ref, vp_ref,
                       *, n_head, d_k, d_v, sm_scale):
    cdt = wq_ref.dtype                        # compute dtype (bf16 by default)
    xq = q_ref[0].astype(cdt)                 # (br, d_model)
    xk = k_ref[0].astype(cdt)
    xv = v_ref[0].astype(cdt)
    xs = sup_ref[0].astype(cdt)

    # One wide matmul for all three gates (Hq|Hk|Hv fused).
    # NOTE: for real model dims keep n_head*d_k a multiple of 128 so these lane
    # slices stay lane-aligned (true for e.g. n_head=8, d_k=64).
    gates = jnp.dot(xs, h_all_ref[...], preferred_element_type=jnp.float32)
    gq = gates[:, : n_head * d_k]
    gk = gates[:, n_head * d_k: 2 * n_head * d_k]
    gv = gates[:, 2 * n_head * d_k:]

    # Softmax scale folded into qp here (O(br*H*d_k) instead of O(H*bq*L) in pass 2).
    qp = jnp.dot(xq, wq_ref[...], preferred_element_type=jnp.float32) * gq * sm_scale
    kp = jnp.dot(xk, wk_ref[...], preferred_element_type=jnp.float32) * gk
    vp = jnp.dot(xv, wv_ref[...], preferred_element_type=jnp.float32) * gv

    # Head-major stores: (br, H*d) row-slab -> per-head (br, d) slabs of (1,H,br,d).
    # Static unrolled loop (n_head is small & static); avoids the wrapper-side
    # HBM reshape/transpose round trip entirely.
    for h in range(n_head):
        qp_ref[0, h] = qp[:, h * d_k:(h + 1) * d_k].astype(qp_ref.dtype)
        kp_ref[0, h] = kp[:, h * d_k:(h + 1) * d_k].astype(kp_ref.dtype)
        vp_ref[0, h] = vp[:, h * d_v:(h + 1) * d_v].astype(vp_ref.dtype)


# ---------------------------------------------------------------------------
# Kernel 2: attention + fc + residual + LayerNorm (tiled over (batch, q-block)).
# The attention-matrix output ref is optional (present only when return_attn=True).
# ---------------------------------------------------------------------------
def _attn_out_kernel(qh_ref, kh_ref, vh_ref, qres_ref, fc_ref, gamma_ref, beta_ref,
                     out_ref, *attn_refs, n_head, d_k, d_v, eps):
    qh = qh_ref[0]                            # (H, bq, d_k)  compute dtype (scale folded in)
    kh = kh_ref[0]                            # (H, Lk, d_k)
    vh = vh_ref[0]                            # (H, Lk, d_v)

    # Batched scores with head as a leading batch dim; the K "transpose" is folded
    # into the contraction (no explicit .T / XLU transpose, no per-head lane slices).
    s = jnp.einsum("hqd,hkd->hqk", qh, kh, preferred_element_type=jnp.float32)
    # TODO(synk): optional attention `mask` not implemented (forward uses mask=None).
    s = s - jnp.max(s, axis=-1, keepdims=True)
    p = jnp.exp(s)
    attn = p * pl.reciprocal(jnp.sum(p, axis=-1, keepdims=True), approx=True)

    # Single cast reused for both the PV einsum and (optionally) the attn writeback.
    attn_c = attn.astype(vh.dtype)
    if attn_refs:
        attn_refs[0][0] = attn_c.astype(attn_refs[0].dtype)

    o = jnp.einsum("hqk,hkd->hqd", attn_c, vh,
                   preferred_element_type=jnp.float32)        # (H, bq, d_v) f32

    # Concat heads along lanes (static per-head slabs) and run ONE full-depth
    # K = H*d_v matmul against the original fc weight (keeps the MXU systolic
    # depth filled instead of n_head shallow K=d_v dots).
    cdt = fc_ref.dtype
    o_cat = jnp.concatenate([o[h] for h in range(n_head)], axis=-1)   # (bq, H*d_v)
    proj = jnp.dot(o_cat.astype(cdt), fc_ref[...], preferred_element_type=jnp.float32)

    # dropout(p=0.1) in eval mode == identity; residual is the pre-projection q.
    resid = proj + qres_ref[0].astype(jnp.float32)

    # LayerNorm over features (biased variance, eps=1e-6), f32 math.
    mean = jnp.mean(resid, axis=-1, keepdims=True)
    var = jnp.mean((resid - mean) ** 2, axis=-1, keepdims=True)
    normed = (resid - mean) * jax.lax.rsqrt(var + eps)
    out = normed * gamma_ref[...].astype(jnp.float32) + beta_ref[...].astype(jnp.float32)
    out_ref[0] = out.astype(out_ref.dtype)


# ---------------------------------------------------------------------------
# Wrapper: MultiHeadAttention_Sub forward.
# ---------------------------------------------------------------------------
def multi_head_attention_sub(q, k, v, sup, params, *, n_head, d_k, d_v, eps=1e-6,
                             compute_dtype=jnp.bfloat16, block_rows=512, block_q=128,
                             return_attn=True):
    wq, wk, wv, hq, hk, hv, fc_w, gamma, beta = params
    B, L, d_model = q.shape
    out_dtype = q.dtype
    cdt = compute_dtype

    # Pre-cast weights to the MXU compute dtype; fuse the three gate weights.
    wq_c, wk_c, wv_c = (w.astype(cdt) for w in (wq, wk, wv))
    h_all = jnp.concatenate([hq, hk, hv], axis=1).astype(cdt)     # (d_model, H*(2dk+dv))
    fc_c = fc_w.astype(cdt)                                       # (H*d_v, d_model)

    # Per-TensorCore budget: safe on v7x (64 MiB physical / 32 MiB scoped default)
    # and trivially within v5e/v6e's 128 MiB.
    vmem_limit = 32 * 1024 * 1024

    def _full_spec(arr):
        return pl.BlockSpec(arr.shape, lambda b, r: (0,) * arr.ndim)

    # ---- pass 1: gated projections, emitted head-major -----------------------
    br = min(block_rows, L)
    nb_r = pl.cdiv(L, br)
    seq_spec = pl.BlockSpec((1, br, d_model), lambda b, r: (b, r, 0))

    def _head_major_spec(d):
        return pl.BlockSpec((1, n_head, br, d), lambda b, r: (b, 0, r, 0))

    proj_kernel = functools.partial(_gated_proj_kernel, n_head=n_head, d_k=d_k,
                                    d_v=d_v, sm_scale=float(d_k) ** -0.5)
    qh, kh, vh = pl.pallas_call(
        proj_kernel,
        out_shape=(
            jax.ShapeDtypeStruct((B, n_head, L, d_k), cdt),
            jax.ShapeDtypeStruct((B, n_head, L, d_k), cdt),
            jax.ShapeDtypeStruct((B, n_head, L, d_v), cdt),
        ),
        grid=(B, nb_r),
        in_specs=[seq_spec, seq_spec, seq_spec, seq_spec,
                  _full_spec(wq_c), _full_spec(wk_c), _full_spec(wv_c), _full_spec(h_all)],
        out_specs=(_head_major_spec(d_k), _head_major_spec(d_k), _head_major_spec(d_v)),
        compiler_params=pltpu.CompilerParams(
            dimension_semantics=("parallel", "parallel"),
            vmem_limit_bytes=vmem_limit),
    )(q, k, v, sup, wq_c, wk_c, wv_c, h_all)

    # ---- pass 2: attention + fc + residual + LayerNorm ------------------------
    bq = min(block_q, L)
    nb_q = pl.cdiv(L, bq)

    if return_attn:
        out_shape = (jax.ShapeDtypeStruct((B, L, d_model), out_dtype),
                     jax.ShapeDtypeStruct((B, n_head, L, L), cdt))   # attn in bf16
        out_specs = (pl.BlockSpec((1, bq, d_model), lambda b, i: (b, i, 0)),
                     pl.BlockSpec((1, n_head, bq, L), lambda b, i: (b, 0, i, 0)))
    else:
        out_shape = jax.ShapeDtypeStruct((B, L, d_model), out_dtype)
        out_specs = pl.BlockSpec((1, bq, d_model), lambda b, i: (b, i, 0))

    attn_kernel = functools.partial(_attn_out_kernel, n_head=n_head, d_k=d_k,
                                    d_v=d_v, eps=eps)
    res = pl.pallas_call(
        attn_kernel,
        out_shape=out_shape,
        grid=(B, nb_q),
        in_specs=[
            pl.BlockSpec((1, n_head, bq, d_k), lambda b, i: (b, 0, i, 0)),
            pl.BlockSpec((1, n_head, L, d_k), lambda b, i: (b, 0, 0, 0)),
            pl.BlockSpec((1, n_head, L, d_v), lambda b, i: (b, 0, 0, 0)),
            pl.BlockSpec((1, bq, d_model), lambda b, i: (b, i, 0)),
            _full_spec(fc_c), _full_spec(gamma), _full_spec(beta),
        ],
        out_specs=out_specs,
        compiler_params=pltpu.CompilerParams(
            dimension_semantics=("parallel", "parallel"),
            vmem_limit_bytes=vmem_limit),
    )(qh, kh, vh, q, fc_c, gamma, beta)

    if return_attn:
        out, attn = res
        return out, attn
    return res, None


# ---------------------------------------------------------------------------
# InferNet-style composition around the Pallas MHA layer.
# ---------------------------------------------------------------------------
def infer_net_forward(q, k, v, z, layer_params, proj_w, proj_b, *, n_head, d_k, d_v):
    # TODO(synk): the reference InferNet composition is ill-formed in PyTorch
    #             (`q += (out, attn)` tuple add, d_v/dropout ctor-arg mixup, and the
    #             final Linear(d_model, 3) on q.mean(-1) requires len_q == d_model);
    #             interpreted here as q = q + layer(q,k,v,z)[0] per layer, and the
    #             trivial (B, 3) mean+projection head is left to XLA.
    for p in layer_params:
        layer_out, _ = multi_head_attention_sub(q, k, v, z, p, n_head=n_head,
                                                d_k=d_k, d_v=d_v, return_attn=False)
        q = q + layer_out
    return jnp.dot(q.mean(axis=-1), proj_w) + proj_b


# ---------------------------------------------------------------------------
# Plain-JAX reference (mirrors the kernel's bf16-matmul / f32-accumulate math,
# including the softmax scale folded into qp before the bf16 cast).
# ---------------------------------------------------------------------------
def reference_forward(q, k, v, sup, params, *, n_head, d_k, d_v, eps=1e-6,
                      compute_dtype=jnp.bfloat16):
    wq, wk, wv, hq, hk, hv, fc_w, gamma, beta = params
    B, L, d_model = q.shape
    cdt, f32 = compute_dtype, jnp.float32

    def proj(x, w, h, dh, scale=1.0):
        y = (jnp.dot(x.astype(cdt), w.astype(cdt), preferred_element_type=f32)
             * jnp.dot(sup.astype(cdt), h.astype(cdt), preferred_element_type=f32)) * scale
        return y.astype(cdt).reshape(B, L, n_head, dh).transpose(0, 2, 1, 3)

    qh = proj(q, wq, hq, d_k, scale=float(d_k) ** -0.5)
    kh = proj(k, wk, hk, d_k)
    vh = proj(v, wv, hv, d_v)

    s = jnp.einsum("bhqd,bhkd->bhqk", qh, kh, preferred_element_type=f32)
    attn = jax.nn.softmax(s, axis=-1)
    o = jnp.einsum("bhqk,bhkd->bhqd", attn.astype(cdt), vh, preferred_element_type=f32)
    o = o.transpose(0, 2, 1, 3).reshape(B, L, n_head * d_v)
    o = jnp.dot(o.astype(cdt), fc_w.astype(cdt), preferred_element_type=f32)
    o = o + q.astype(f32)
    mean = jnp.mean(o, axis=-1, keepdims=True)
    var = jnp.mean((o - mean) ** 2, axis=-1, keepdims=True)
    o = (o - mean) / jnp.sqrt(var + eps) * gamma[0] + beta[0]
    return o.astype(q.dtype), attn.astype(f32)


def make_mha_params(key, d_model, n_head, d_k, d_v):
    ks = jax.random.split(key, 7)
    scale = 1.0 / (d_model ** 0.5)
    wq = jax.random.normal(ks[0], (d_model, n_head * d_k), jnp.float32) * scale
    wk = jax.random.normal(ks[1], (d_model, n_head * d_k), jnp.float32) * scale
    wv = jax.random.normal(ks[2], (d_model, n_head * d_v), jnp.float32) * scale
    hq = jax.random.normal(ks[3], (d_model, n_head * d_k), jnp.float32) * scale
    hk = jax.random.normal(ks[4], (d_model, n_head * d_k), jnp.float32) * scale
    hv = jax.random.normal(ks[5], (d_model, n_head * d_v), jnp.float32) * scale
    fc = jax.random.normal(ks[6], (n_head * d_v, d_model), jnp.float32) * scale
    gamma = jnp.ones((1, d_model), jnp.float32)
    beta = jnp.zeros((1, d_model), jnp.float32)
    return (wq, wk, wv, hq, hk, hv, fc, gamma, beta)


if __name__ == "__main__":
    # Small deterministic config (L == d_model so the InferNet head is well-defined).
    B, L = 2, 32
    d_model, n_head, d_k, d_v = 32, 2, 16, 16

    root = jax.random.PRNGKey(0)
    k_in, k_p0, k_p1, k_proj = jax.random.split(root, 4)
    ki = jax.random.split(k_in, 4)
    q = jax.random.normal(ki[0], (B, L, d_model), jnp.float32)
    k = jax.random.normal(ki[1], (B, L, d_model), jnp.float32)
    v = jax.random.normal(ki[2], (B, L, d_model), jnp.float32)
    sup = jax.random.normal(ki[3], (B, L, d_model), jnp.float32)

    params = make_mha_params(k_p0, d_model, n_head, d_k, d_v)

    # Variant that returns the attention matrix (matches the PyTorch module output).
    out, attn = multi_head_attention_sub(q, k, v, sup, params,
                                         n_head=n_head, d_k=d_k, d_v=d_v,
                                         return_attn=True)
    jax.block_until_ready((out, attn))

    ref_out, ref_attn = reference_forward(q, k, v, sup, params,
                                          n_head=n_head, d_k=d_k, d_v=d_v)

    assert out.shape == (B, L, d_model) and attn.shape == (B, n_head, L, L)
    assert jnp.allclose(out, ref_out, atol=3e-2, rtol=3e-2), \
        float(jnp.max(jnp.abs(out - ref_out)))
    assert jnp.allclose(attn.astype(jnp.float32), ref_attn, atol=3e-2, rtol=3e-2), \
        float(jnp.max(jnp.abs(attn.astype(jnp.float32) - ref_attn)))

    # Attn-free fast path used by the InferNet composition.
    out_fast, _ = multi_head_attention_sub(q, k, v, sup, params,
                                           n_head=n_head, d_k=d_k, d_v=d_v,
                                           return_attn=False)
    jax.block_until_ready(out_fast)
    assert jnp.allclose(out_fast, out, atol=1e-5, rtol=1e-5)

    # Exercise the InferNet-style composition (2 layers + mean/projection head).
    kp = jax.random.split(k_proj, 2)
    proj_w = jax.random.normal(kp[0], (d_model, 3), jnp.float32) / (d_model ** 0.5)
    proj_b = jax.random.normal(kp[1], (3,), jnp.float32) * 0.1
    layer_params = [params, make_mha_params(k_p1, d_model, n_head, d_k, d_v)]
    pred = infer_net_forward(q, k, v, sup, layer_params, proj_w, proj_b,
                             n_head=n_head, d_k=d_k, d_v=d_v)
    jax.block_until_ready(pred)
    assert pred.shape == (B, 3) and bool(jnp.all(jnp.isfinite(pred)))

    print("KERNEL_OK")
</pallas_src>

<mosaic_0001>
module attributes {stable_mosaic.version = 11 : i64} {
  func.func @_gated_proj_kernel(%arg0: i32, %arg1: i32, %arg2: memref<1x32x32xf32, #tpu.memory_space<vmem>>, %arg3: memref<1x32x32xf32, #tpu.memory_space<vmem>>, %arg4: memref<1x32x32xf32, #tpu.memory_space<vmem>>, %arg5: memref<1x32x32xf32, #tpu.memory_space<vmem>>, %arg6: memref<32x32xbf16, #tpu.memory_space<vmem>>, %arg7: memref<32x32xbf16, #tpu.memory_space<vmem>>, %arg8: memref<32x32xbf16, #tpu.memory_space<vmem>>, %arg9: memref<32x96xbf16, #tpu.memory_space<vmem>>, %arg10: memref<1x2x32x16xbf16, #tpu.memory_space<vmem>>, %arg11: memref<1x2x32x16xbf16, #tpu.memory_space<vmem>>, %arg12: memref<1x2x32x16xbf16, #tpu.memory_space<vmem>>) attributes {dimension_semantics = [#tpu.dimension_semantics<parallel>, #tpu.dimension_semantics<parallel>], iteration_bounds = array<i64: 2, 1>, scalar_prefetch = 0 : i64, scratch_operands = 0 : i64, tpu.core_type = #tpu.core_type<tc>, window_params = [{transform_indices = @transform_0, window_bounds = array<i64: 1, 32, 32>}, {transform_indices = @transform_1, window_bounds = array<i64: 1, 32, 32>}, {transform_indices = @transform_2, window_bounds = array<i64: 1, 32, 32>}, {transform_indices = @transform_3, window_bounds = array<i64: 1, 32, 32>}, {pipeline_mode = #tpu.pipeline_mode<synchronous>, transform_indices = @transform_4, window_bounds = array<i64: 32, 32>}, {pipeline_mode = #tpu.pipeline_mode<synchronous>, transform_indices = @transform_5, window_bounds = array<i64: 32, 32>}, {pipeline_mode = #tpu.pipeline_mode<synchronous>, transform_indices = @transform_6, window_bounds = array<i64: 32, 32>}, {pipeline_mode = #tpu.pipeline_mode<synchronous>, transform_indices = @transform_7, window_bounds = array<i64: 32, 96>}, {transform_indices = @transform_8, window_bounds = array<i64: 1, 2, 32, 16>}, {transform_indices = @transform_9, window_bounds = array<i64: 1, 2, 32, 16>}, {transform_indices = @transform_10, window_bounds = array<i64: 1, 2, 32, 16>}]} {
    %c0 = arith.constant 0 : index
    %c0_0 = arith.constant 0 : index
    %c0_1 = arith.constant 0 : index
    %0 = vector.load %arg2[%c0, %c0_0, %c0_1] : memref<1x32x32xf32, #tpu.memory_space<vmem>>, vector<1x32x32xf32>
    %1 = vector.shape_cast %0 : vector<1x32x32xf32> to vector<32x32xf32>
    %2 = arith.truncf %1 : vector<32x32xf32> to vector<32x32xbf16>
    %c0_2 = arith.constant 0 : index
    %c0_3 = arith.constant 0 : index
    %c0_4 = arith.constant 0 : index
    %3 = vector.load %arg3[%c0_2, %c0_3, %c0_4] : memref<1x32x32xf32, #tpu.memory_space<vmem>>, vector<1x32x32xf32>
    %4 = vector.shape_cast %3 : vector<1x32x32xf32> to vector<32x32xf32>
    %5 = arith.truncf %4 : vector<32x32xf32> to vector<32x32xbf16>
    %c0_5 = arith.constant 0 : index
    %c0_6 = arith.constant 0 : index
    %c0_7 = arith.constant 0 : index
    %6 = vector.load %arg4[%c0_5, %c0_6, %c0_7] : memref<1x32x32xf32, #tpu.memory_space<vmem>>, vector<1x32x32xf32>
    %7 = vector.shape_cast %6 : vector<1x32x32xf32> to vector<32x32xf32>
    %8 = arith.truncf %7 : vector<32x32xf32> to vector<32x32xbf16>
    %c0_8 = arith.constant 0 : index
    %c0_9 = arith.constant 0 : index
    %c0_10 = arith.constant 0 : index
    %9 = vector.load %arg5[%c0_8, %c0_9, %c0_10] : memref<1x32x32xf32, #tpu.memory_space<vmem>>, vector<1x32x32xf32>
    %10 = vector.shape_cast %9 : vector<1x32x32xf32> to vector<32x32xf32>
    %11 = arith.truncf %10 : vector<32x32xf32> to vector<32x32xbf16>
    %c0_11 = arith.constant 0 : index
    %c0_12 = arith.constant 0 : index
    %12 = vector.load %arg9[%c0_11, %c0_12] : memref<32x96xbf16, #tpu.memory_space<vmem>>, vector<32x96xbf16>
    %cst = arith.constant dense<0.000000e+00> : vector<32x96xf32>
    %13 = tpu.matmul %11, %12, %cst {dimension_numbers = #tpu.dot_dimension_numbers<[1], [0], [0], [1], [0, 0, 1, 1], [], []>} : vector<32x32xbf16>, vector<32x96xbf16>, vector<32x96xf32> -> vector<32x96xf32>
    %14 = vector.extract_strided_slice %13 {offsets = [0, 0], sizes = [32, 32], strides = [1, 1]} : vector<32x96xf32> to vector<32x32xf32>
    %15 = vector.extract_strided_slice %13 {offsets = [0, 32], sizes = [32, 32], strides = [1, 1]} : vector<32x96xf32> to vector<32x32xf32>
    %16 = vector.extract_strided_slice %13 {offsets = [0, 64], sizes = [32, 32], strides = [1, 1]} : vector<32x96xf32> to vector<32x32xf32>
    %c0_13 = arith.constant 0 : index
    %c0_14 = arith.constant 0 : index
    %17 = vector.load %arg6[%c0_13, %c0_14] : memref<32x32xbf16, #tpu.memory_space<vmem>>, vector<32x32xbf16>
    %cst_15 = arith.constant dense<0.000000e+00> : vector<32x32xf32>
    %18 = tpu.matmul %2, %17, %cst_15 {dimension_numbers = #tpu.dot_dimension_numbers<[1], [0], [0], [1], [0, 0, 1, 1], [], []>} : vector<32x32xbf16>, vector<32x32xbf16>, vector<32x32xf32> -> vector<32x32xf32>
    %19 = arith.mulf %18, %14 : vector<32x32xf32>
    %cst_16 = arith.constant 2.500000e-01 : f32
    %20 = vector.broadcast %cst_16 : f32 to vector<32x32xf32>
    %21 = arith.mulf %19, %20 : vector<32x32xf32>
    %c0_17 = arith.constant 0 : index
    %c0_18 = arith.constant 0 : index
    %22 = vector.load %arg7[%c0_17, %c0_18] : memref<32x32xbf16, #tpu.memory_space<vmem>>, vector<32x32xbf16>
    %cst_19 = arith.constant dense<0.000000e+00> : vector<32x32xf32>
    %23 = tpu.matmul %5, %22, %cst_19 {dimension_numbers = #tpu.dot_dimension_numbers<[1], [0], [0], [1], [0, 0, 1, 1], [], []>} : vector<32x32xbf16>, vector<32x32xbf16>, vector<32x32xf32> -> vector<32x32xf32>
    %24 = arith.mulf %23, %15 : vector<32x32xf32>
    %c0_20 = arith.constant 0 : index
    %c0_21 = arith.constant 0 : index
    %25 = vector.load %arg8[%c0_20, %c0_21] : memref<32x32xbf16, #tpu.memory_space<vmem>>, vector<32x32xbf16>
    %cst_22 = arith.constant dense<0.000000e+00> : vector<32x32xf32>
    %26 = tpu.matmul %8, %25, %cst_22 {dimension_numbers = #tpu.dot_dimension_numbers<[1], [0], [0], [1], [0, 0, 1, 1], [], []>} : vector<32x32xbf16>, vector<32x32xbf16>, vector<32x32xf32> -> vector<32x32xf32>
    %27 = arith.mulf %26, %16 : vector<32x32xf32>
    %28 = vector.extract_strided_slice %21 {offsets = [0, 0], sizes = [32, 16], strides = [1, 1]} : vector<32x32xf32> to vector<32x16xf32>
    %29 = arith.truncf %28 : vector<32x16xf32> to vector<32x16xbf16>
    %c0_23 = arith.constant 0 : index
    %c0_24 = arith.constant 0 : index
    %c0_25 = arith.constant 0 : index
    %c0_26 = arith.constant 0 : index
    %30 = vector.load %arg10[%c0_23, %c0_24, %c0_25, %c0_26] : memref<1x2x32x16xbf16, #tpu.memory_space<vmem>>, vector<1x1x32x16xbf16>
    %31 = vector.shape_cast %30 : vector<1x1x32x16xbf16> to vector<32x16xbf16>
    %32 = vector.shape_cast %29 : vector<32x16xbf16> to vector<1x1x32x16xbf16>
    tpu.vector_store %arg10[%c0_23, %c0_24, %c0_25, %c0_26], %32 {strides = array<i32>} : memref<1x2x32x16xbf16, #tpu.memory_space<vmem>>, vector<1x1x32x16xbf16>,
    %33 = vector.extract_strided_slice %24 {offsets = [0, 0], sizes = [32, 16], strides = [1, 1]} : vector<32x32xf32> to vector<32x16xf32>
    %34 = arith.truncf %33 : vector<32x16xf32> to vector<32x16xbf16>
    %c0_27 = arith.constant 0 : index
    %c0_28 = arith.constant 0 : index
    %c0_29 = arith.constant 0 : index
    %c0_30 = arith.constant 0 : index
    %35 = vector.load %arg11[%c0_27, %c0_28, %c0_29, %c0_30] : memref<1x2x32x16xbf16, #tpu.memory_space<vmem>>, vector<1x1x32x16xbf16>
    %36 = vector.shape_cast %35 : vector<1x1x32x16xbf16> to vector<32x16xbf16>
    %37 = vector.shape_cast %34 : vector<32x16xbf16> to vector<1x1x32x16xbf16>
    tpu.vector_store %arg11[%c0_27, %c0_28, %c0_29, %c0_30], %37 {strides = array<i32>} : memref<1x2x32x16xbf16, #tpu.memory_space<vmem>>, vector<1x1x32x16xbf16>,
    %38 = vector.extract_strided_slice %27 {offsets = [0, 0], sizes = [32, 16], strides = [1, 1]} : vector<32x32xf32> to vector<32x16xf32>
    %39 = arith.truncf %38 : vector<32x16xf32> to vector<32x16xbf16>
    %c0_31 = arith.constant 0 : index
    %c0_32 = arith.constant 0 : index
    %c0_33 = arith.constant 0 : index
    %c0_34 = arith.constant 0 : index
    %40 = vector.load %arg12[%c0_31, %c0_32, %c0_33, %c0_34] : memref<1x2x32x16xbf16, #tpu.memory_space<vmem>>, vector<1x1x32x16xbf16>
    %41 = vector.shape_cast %40 : vector<1x1x32x16xbf16> to vector<32x16xbf16>
    %42 = vector.shape_cast %39 : vector<32x16xbf16> to vector<1x1x32x16xbf16>
    tpu.vector_store %arg12[%c0_31, %c0_32, %c0_33, %c0_34], %42 {strides = array<i32>} : memref<1x2x32x16xbf16, #tpu.memory_space<vmem>>, vector<1x1x32x16xbf16>,
    %43 = vector.extract_strided_slice %21 {offsets = [0, 16], sizes = [32, 16], strides = [1, 1]} : vector<32x32xf32> to vector<32x16xf32>
    %44 = arith.truncf %43 : vector<32x16xf32> to vector<32x16xbf16>
    %c0_35 = arith.constant 0 : index
    %c1 = arith.constant 1 : index
    %c0_36 = arith.constant 0 : index
    %c0_37 = arith.constant 0 : index
    %45 = vector.load %arg10[%c0_35, %c1, %c0_36, %c0_37] : memref<1x2x32x16xbf16, #tpu.memory_space<vmem>>, vector<1x1x32x16xbf16>
    %46 = vector.shape_cast %45 : vector<1x1x32x16xbf16> to vector<32x16xbf16>
    %47 = vector.shape_cast %44 : vector<32x16xbf16> to vector<1x1x32x16xbf16>
    tpu.vector_store %arg10[%c0_35, %c1, %c0_36, %c0_37], %47 {strides = array<i32>} : memref<1x2x32x16xbf16, #tpu.memory_space<vmem>>, vector<1x1x32x16xbf16>,
    %48 = vector.extract_strided_slice %24 {offsets = [0, 16], sizes = [32, 16], strides = [1, 1]} : vector<32x32xf32> to vector<32x16xf32>
    %49 = arith.truncf %48 : vector<32x16xf32> to vector<32x16xbf16>
    %c0_38 = arith.constant 0 : index
    %c1_39 = arith.constant 1 : index
    %c0_40 = arith.constant 0 : index
    %c0_41 = arith.constant 0 : index
    %50 = vector.load %arg11[%c0_38, %c1_39, %c0_40, %c0_41] : memref<1x2x32x16xbf16, #tpu.memory_space<vmem>>, vector<1x1x32x16xbf16>
    %51 = vector.shape_cast %50 : vector<1x1x32x16xbf16> to vector<32x16xbf16>
    %52 = vector.shape_cast %49 : vector<32x16xbf16> to vector<1x1x32x16xbf16>
    tpu.vector_store %arg11[%c0_38, %c1_39, %c0_40, %c0_41], %52 {strides = array<i32>} : memref<1x2x32x16xbf16, #tpu.memory_space<vmem>>, vector<1x1x32x16xbf16>,
    %53 = vector.extract_strided_slice %27 {offsets = [0, 16], sizes = [32, 16], strides = [1, 1]} : vector<32x32xf32> to vector<32x16xf32>
    %54 = arith.truncf %53 : vector<32x16xf32> to vector<32x16xbf16>
    %c0_42 = arith.constant 0 : index
    %c1_43 = arith.constant 1 : index
    %c0_44 = arith.constant 0 : index
    %c0_45 = arith.constant 0 : index
    %55 = vector.load %arg12[%c0_42, %c1_43, %c0_44, %c0_45] : memref<1x2x32x16xbf16, #tpu.memory_space<vmem>>, vector<1x1x32x16xbf16>
    %56 = vector.shape_cast %55 : vector<1x1x32x16xbf16> to vector<32x16xbf16>
    %57 = vector.shape_cast %54 : vector<32x16xbf16> to vector<1x1x32x16xbf16>
    tpu.vector_store %arg12[%c0_42, %c1_43, %c0_44, %c0_45], %57 {strides = array<i32>} : memref<1x2x32x16xbf16, #tpu.memory_space<vmem>>, vector<1x1x32x16xbf16>,
    return
  }
  func.func @transform_0(%arg0: i32, %arg1: i32) -> (i32, i32, i32) {
    %c0_i32 = arith.constant 0 : i32
    %c0_i32_0 = arith.constant 0 : i32
    return %arg0, %arg1, %c0_i32 : i32, i32, i32
  }
  func.func @transform_1(%arg0: i32, %arg1: i32) -> (i32, i32, i32) {
    %c0_i32 = arith.constant 0 : i32
    %c0_i32_0 = arith.constant 0 : i32
    return %arg0, %arg1, %c0_i32 : i32, i32, i32
  }
  func.func @transform_2(%arg0: i32, %arg1: i32) -> (i32, i32, i32) {
    %c0_i32 = arith.constant 0 : i32
    %c0_i32_0 = arith.constant 0 : i32
    return %arg0, %arg1, %c0_i32 : i32, i32, i32
  }
  func.func @transform_3(%arg0: i32, %arg1: i32) -> (i32, i32, i32) {
    %c0_i32 = arith.constant 0 : i32
    %c0_i32_0 = arith.constant 0 : i32
    return %arg0, %arg1, %c0_i32 : i32, i32, i32
  }
  func.func @transform_4(%arg0: i32, %arg1: i32) -> (i32, i32) {
    %c0_i32 = arith.constant 0 : i32
    %c0_i32_0 = arith.constant 0 : i32
    %c0_i32_1 = arith.constant 0 : i32
    return %c0_i32, %c0_i32_0 : i32, i32
  }
  func.func @transform_5(%arg0: i32, %arg1: i32) -> (i32, i32) {
    %c0_i32 = arith.constant 0 : i32
    %c0_i32_0 = arith.constant 0 : i32
    %c0_i32_1 = arith.constant 0 : i32
    return %c0_i32, %c0_i32_0 : i32, i32
  }
  func.func @transform_6(%arg0: i32, %arg1: i32) -> (i32, i32) {
    %c0_i32 = arith.constant 0 : i32
    %c0_i32_0 = arith.constant 0 : i32
    %c0_i32_1 = arith.constant 0 : i32
    return %c0_i32, %c0_i32_0 : i32, i32
  }
  func.func @transform_7(%arg0: i32, %arg1: i32) -> (i32, i32) {
    %c0_i32 = arith.constant 0 : i32
    %c0_i32_0 = arith.constant 0 : i32
    %c0_i32_1 = arith.constant 0 : i32
    return %c0_i32, %c0_i32_0 : i32, i32
  }
  func.func @transform_8(%arg0: i32, %arg1: i32) -> (i32, i32, i32, i32) {
    %c0_i32 = arith.constant 0 : i32
    %c0_i32_0 = arith.constant 0 : i32
    %c0_i32_1 = arith.constant 0 : i32
    return %arg0, %c0_i32, %arg1, %c0_i32_0 : i32, i32, i32, i32
  }
  func.func @transform_9(%arg0: i32, %arg1: i32) -> (i32, i32, i32, i32) {
    %c0_i32 = arith.constant 0 : i32
    %c0_i32_0 = arith.constant 0 : i32
    %c0_i32_1 = arith.constant 0 : i32
    return %arg0, %c0_i32, %arg1, %c0_i32_0 : i32, i32, i32, i32
  }
  func.func @transform_10(%arg0: i32, %arg1: i32) -> (i32, i32, i32, i32) {
    %c0_i32 = arith.constant 0 : i32
    %c0_i32_0 = arith.constant 0 : i32
    %c0_i32_1 = arith.constant 0 : i32
    return %arg0, %c0_i32, %arg1, %c0_i32_0 : i32, i32, i32, i32
  }
}

</mosaic_0001>

<llo_original>
// kernel: tpu_custom_call.1
$region0: #{tpu_custom_call.1}
  #allocation0 [shape = 'u32[]', space=smem, size = 0x4, offset = 0x4, fixed_abs, tag = 'smem constant byte address 0x4 - core index']
  #allocation1 [shape = 'u32[144,128]{1,0:T(1,128)}', space=vmem, size = 0x12000, scoped, tag = 'internal scratch']
  %s0 = inlined_call_operand.hbm [shape: f32[2,32,32], index: 0, kind: input, shape index: {}]
  %s1 = inlined_call_operand.hbm [shape: f32[2,32,32], index: 1, kind: input, shape index: {}]
  %s2 = inlined_call_operand.hbm [shape: f32[2,32,32], index: 2, kind: input, shape index: {}]
  %s3 = inlined_call_operand.hbm [shape: f32[2,32,32], index: 3, kind: input, shape index: {}]
  %s4 = inlined_call_operand.hbm [shape: bf16[32,32], index: 4, kind: input, shape index: {}]
  %s5 = inlined_call_operand.vmem [shape: bf16[32,32], index: 5, kind: input, shape index: {}]
  %s6 = inlined_call_operand.hbm [shape: bf16[32,32], index: 6, kind: input, shape index: {}]
  %s7 = inlined_call_operand.hbm [shape: bf16[32,96], index: 7, kind: input, shape index: {}]
  %s8 = inlined_call_operand.vmem [shape: bf16[2,2,32,16], index: 8, kind: output, shape index: {0}]
  %s9 = inlined_call_operand.vmem [shape: bf16[2,2,32,16], index: 9, kind: output, shape index: {1}]
  %s10 = inlined_call_operand.vmem [shape: bf16[2,2,32,16], index: 10, kind: output, shape index: {2}]
  %11 = xla_tuple %s8, %s9, %s10
  %s12 = sld [smem:[#allocation0]]
  $region109: #{tpu_custom_call.1} parent=0
    _
  %s14 = ssub.s32 1, %s12
  %s15 = scalar_select 0, %s14, %s12
  $region1: #{tpu_custom_call.1} parent=0
    #allocation2 [shape = 'u8[32768]{0}', space=vmem, size = 0x8000, scoped, tag = 'input window, operand 0']
    #allocation3 [shape = 's32[2]{0}', space=sflag, size = 0x8, scoped, tag = 'scoped memory for tpu_custom_call.1']
    #allocation4 [shape = 'u8[32768]{0}', space=vmem, size = 0x8000, scoped, tag = 'input window, operand 1']
    #allocation5 [shape = 's32[2]{0}', space=sflag, size = 0x8, scoped, tag = 'scoped memory for tpu_custom_call.1']
    #allocation6 [shape = 'u8[32768]{0}', space=vmem, size = 0x8000, scoped, tag = 'input window, operand 2']
    #allocation7 [shape = 'u8[32768]{0}', space=vmem, size = 0x8000, scoped, tag = 'input window, operand 3']
    #allocation8 [shape = 's32[2]{0}', space=sflag, size = 0x8, scoped, tag = 'scoped memory for tpu_custom_call.1']
    #allocation9 [shape = 'u8[8192]{0}', space=vmem, size = 0x2000, scoped, tag = 'input window, operand 4, single buffered']
    #allocation10 [shape = 'u8[8192]{0}', space=vmem, size = 0x2000, scoped, tag = 'input window, operand 6, single buffered']
    #allocation11 [shape = 's32[1]{0}', space=sflag, size = 0x4, scoped, tag = 'scoped memory for tpu_custom_call.1']
    #allocation12 [shape = 'u8[8192]{0}', space=vmem, size = 0x2000, scoped, tag = 'input window, operand 7, single buffered']
    %16 = vsyncpa [#allocation3], 0
    %s17 = scalar_lea.sflag [#allocation3], 1
    %18 = vsyncpa %s17, 0
    %19 = vsyncpa [#allocation5], 0
    %s20 = scalar_lea.sflag [#allocation5], 1
    %21 = vsyncpa %s20, 0
    %22 = vsyncpa [#allocation8], 0
    %s23 = scalar_lea.sflag [#allocation8], 1
    %24 = vsyncpa %s23, 0
    %25 = vsyncpa [#allocation11], 0
    loop: start=0, step=1, limit=4
    $region2: #{tpu_custom_call.1} parent=1 // loop_pre_header
      _
    $region3: #{tpu_custom_call.1} parent=1 // loop_header
      %s27 = sphi 0, %s31
      %p28 = scmp.ge.s32.totalorder %s27, 4
      %s34 = sphi 0, %s46
      %s35 = sphi 0, %s42
      %s36 = sphi 0, %s34
      %s37 = sphi 0, %s35
      %s38 = sphi 0, %s36
      %s39 = sphi 0, %s37
      %s51 = sphi 0, %s53
      %s54 = sphi 0, %s51
      %s55 = sphi 0, %s54
      %s71 = sphi 0, %s55
      %s79 = sphi 0, %s81
      %s82 = sphi 0, %s79
      %s83 = sphi 0, %s82
      %s99 = sphi 0, %s83
      %s107 = sphi 0, %s109
      %s110 = sphi 0, %s107
      %s111 = sphi 0, %s110
      %s127 = sphi 0, %s111
      %s135 = sphi 0, %s137
      %s138 = sphi 0, %s135
      %s139 = sphi 0, %s138
      %s155 = sphi 0, %s139
      %s159 = sphi 0, %s159
      %s161 = sphi 0, %s159
      %s162 = sphi 0, %s161
      %s176 = sphi 0, %s162
      %s180 = sphi 0, %s180
      %s182 = sphi 0, %s180
      %s183 = sphi 0, %s182
      %s197 = sphi 0, %s183
      %s201 = sphi 0, %s201
      %s203 = sphi 0, %s201
      %s204 = sphi 0, %s203
      %s218 = sphi 0, %s204
      %s222 = sphi 0, %s222
      %s224 = sphi 0, %s222
      %s225 = sphi 0, %s224
      %s239 = sphi 0, %s225
      %s247 = sphi 0, %s249
      %s250 = sphi 0, %s247
      %s251 = sphi 0, %s250
      %s267 = sphi 0, %s251
      %s275 = sphi 0, %s277
      %s278 = sphi 0, %s275
      %s279 = sphi 0, %s278
      %s295 = sphi 0, %s279
      %s303 = sphi 0, %s305
      %s306 = sphi 0, %s303
      %s307 = sphi 0, %s306
      %s323 = sphi 0, %s307
    $region4: #{tpu_custom_call.1} parent=1 // loop_header_branch
      %30 = sbr.rel (%p28) target = $region8
    $region5: #{tpu_custom_call.1} parent=1 // loop_body
      %s32 = ssub.s32 %s27, 1
      %s33 = ssub.s32 %s27, 2
      %s40 = sadd.s32 1, %s35
      %p41 = scmp.ge.s32.totalorder %s40, 1
      %s42 = scalar_select %p41, 0, %s40
      %s43 = sadd.s32 1, %s34
      %s44 = scalar_select %p41, %s43, %s34
      %p45 = scmp.ge.s32.totalorder %s44, 2
      %s46 = scalar_select %p45, 0, %s44
      %s47 = ssub.s32 %s34, %s46
      %s48 = ssub.s32 %s35, %s42
      %s49 = sor.u32 %s47, %s48
      %p50 = scmp.eq.s32.totalorder %s49, 0
      %s52 = sadd.s32 %s51, 1
      %s53 = scalar_select %p50, %s51, %s52
      %p56 = pneg %p50
      %p57 = scmp.eq.s32.totalorder %s27, 1
      %p58 = por %p56, %p57
      %p59 = scmp.ne.s32.totalorder %s51, %s54
      %p60 = scmp.eq.s32.totalorder %s27, 0
      %p61 = por %p59, %p60
      %p62 = scmp.ne.s32.totalorder %s51, %s54
      %p63 = scmp.eq.s32.totalorder %s32, 1
      %p64 = por %p62, %p63
      %p65 = scmp.ne.s32.totalorder %s54, %s55
      %p66 = scmp.eq.s32.totalorder %s32, 0
      %p67 = por %p65, %p66
      %p68 = scmp.ne.s32.totalorder %s54, %s55
      %p69 = scmp.eq.s32.totalorder %s33, 1
      %p70 = por %p68, %p69
      %p72 = scmp.ne.s32.totalorder %s55, %s71
      %p73 = scmp.eq.s32.totalorder %s33, 0
      %p74 = por %p72, %p73
      %s75 = ssub.s32 %s34, %s46
      %s76 = ssub.s32 %s35, %s42
      %s77 = sor.u32 %s75, %s76
      %p78 = scmp.eq.s32.totalorder %s77, 0
      %s80 = sadd.s32 %s79, 1
      %s81 = scalar_select %p78, %s79, %s80
      %p84 = pneg %p78
      %p85 = scmp.eq.s32.totalorder %s27, 1
      %p86 = por %p84, %p85
      %p87 = scmp.ne.s32.totalorder %s79, %s82
      %p88 = scmp.eq.s32.totalorder %s27, 0
      %p89 = por %p87, %p88
      %p90 = scmp.ne.s32.totalorder %s79, %s82
      %p91 = scmp.eq.s32.totalorder %s32, 1
      %p92 = por %p90, %p91
      %p93 = scmp.ne.s32.totalorder %s82, %s83
      %p94 = scmp.eq.s32.totalorder %s32, 0
      %p95 = por %p93, %p94
      %p96 = scmp.ne.s32.totalorder %s82, %s83
      %p97 = scmp.eq.s32.totalorder %s33, 1
      %p98 = por %p96, %p97
      %p100 = scmp.ne.s32.totalorder %s83, %s99
      %p101 = scmp.eq.s32.totalorder %s33, 0
      %p102 = por %p100, %p101
      %s103 = ssub.s32 %s34, %s46
      %s104 = ssub.s32 %s35, %s42
      %s105 = sor.u32 %s103, %s104
      %p106 = scmp.eq.s32.totalorder %s105, 0
      %s108 = sadd.s32 %s107, 1
      %s109 = scalar_select %p106, %s107, %s108
      %p112 = pneg %p106
      %p113 = scmp.eq.s32.totalorder %s27, 1
      %p114 = por %p112, %p113
      %p115 = scmp.ne.s32.totalorder %s107, %s110
      %p116 = scmp.eq.s32.totalorder %s27, 0
      %p117 = por %p115, %p116
      %p118 = scmp.ne.s32.totalorder %s107, %s110
      %p119 = scmp.eq.s32.totalorder %s32, 1
      %p120 = por %p118, %p119
      %p121 = scmp.ne.s32.totalorder %s110, %s111
      %p122 = scmp.eq.s32.totalorder %s32, 0
      %p123 = por %p121, %p122
      %p124 = scmp.ne.s32.totalorder %s110, %s111
      %p125 = scmp.eq.s32.totalorder %s33, 1
      %p126 = por %p124, %p125
      %p128 = scmp.ne.s32.totalorder %s111, %s127
      %p129 = scmp.eq.s32.totalorder %s33, 0
      %p130 = por %p128, %p129
      %s131 = ssub.s32 %s34, %s46
      %s132 = ssub.s32 %s35, %s42
      %s133 = sor.u32 %s131, %s132
      %p134 = scmp.eq.s32.totalorder %s133, 0
      %s136 = sadd.s32 %s135, 1
      %s137 = scalar_select %p134, %s135, %s136
      %p140 = pneg %p134
      %p141 = scmp.eq.s32.totalorder %s27, 1
      %p142 = por %p140, %p141
      %p143 = scmp.ne.s32.totalorder %s135, %s138
      %p144 = scmp.eq.s32.totalorder %s27, 0
      %p145 = por %p143, %p144
      %p146 = scmp.ne.s32.totalorder %s135, %s138
      %p147 = scmp.eq.s32.totalorder %s32, 1
      %p148 = por %p146, %p147
      %p149 = scmp.ne.s32.totalorder %s138, %s139
      %p150 = scmp.eq.s32.totalorder %s32, 0
      %p151 = por %p149, %p150
      %p152 = scmp.ne.s32.totalorder %s138, %s139
      %p153 = scmp.eq.s32.totalorder %s33, 1
      %p154 = por %p152, %p153
      %p156 = scmp.ne.s32.totalorder %s139, %s155
      %p157 = scmp.eq.s32.totalorder %s33, 0
      %p158 = por %p156, %p157
      %s160 = sadd.s32 %s159, 1
      %p163 = scmp.eq.s32.totalorder %s27, 1
      %p164 = scmp.ne.s32.totalorder %s159, %s161
      %p165 = scmp.eq.s32.totalorder %s27, 0
      %p166 = por %p164, %p165
      %p167 = scmp.ne.s32.totalorder %s159, %s161
      %p168 = scmp.eq.s32.totalorder %s32, 1
      %p169 = por %p167, %p168
      %p170 = scmp.ne.s32.totalorder %s161, %s162
      %p171 = scmp.eq.s32.totalorder %s32, 0
      %p172 = por %p170, %p171
      %p173 = scmp.ne.s32.totalorder %s161, %s162
      %p174 = scmp.eq.s32.totalorder %s33, 1
      %p175 = por %p173, %p174
      %p177 = scmp.ne.s32.totalorder %s162, %s176
      %p178 = scmp.eq.s32.totalorder %s33, 0
      %p179 = por %p177, %p178
      %s181 = sadd.s32 %s180, 1
      %p184 = scmp.eq.s32.totalorder %s27, 1
      %p185 = scmp.ne.s32.totalorder %s180, %s182
      %p186 = scmp.eq.s32.totalorder %s27, 0
      %p187 = por %p185, %p186
      %p188 = scmp.ne.s32.totalorder %s180, %s182
      %p189 = scmp.eq.s32.totalorder %s32, 1
      %p190 = por %p188, %p189
      %p191 = scmp.ne.s32.totalorder %s182, %s183
      %p192 = scmp.eq.s32.totalorder %s32, 0
      %p193 = por %p191, %p192
      %p194 = scmp.ne.s32.totalorder %s182, %s183
      %p195 = scmp.eq.s32.totalorder %s33, 1
      %p196 = por %p194, %p195
      %p198 = scmp.ne.s32.totalorder %s183, %s197
      %p199 = scmp.eq.s32.totalorder %s33, 0
      %p200 = por %p198, %p199
      %s202 = sadd.s32 %s201, 1
      %p205 = scmp.eq.s32.totalorder %s27, 1
      %p206 = scmp.ne.s32.totalorder %s201, %s203
      %p207 = scmp.eq.s32.totalorder %s27, 0
      %p208 = por %p206, %p207
      %p209 = scmp.ne.s32.totalorder %s201, %s203
      %p210 = scmp.eq.s32.totalorder %s32, 1
      %p211 = por %p209, %p210
      %p212 = scmp.ne.s32.totalorder %s203, %s204
      %p213 = scmp.eq.s32.totalorder %s32, 0
      %p214 = por %p212, %p213
      %p215 = scmp.ne.s32.totalorder %s203, %s204
      %p216 = scmp.eq.s32.totalorder %s33, 1
      %p217 = por %p215, %p216
      %p219 = scmp.ne.s32.totalorder %s204, %s218
      %p220 = scmp.eq.s32.totalorder %s33, 0
      %p221 = por %p219, %p220
      %s223 = sadd.s32 %s222, 1
      %p226 = scmp.eq.s32.totalorder %s27, 1
      %p227 = scmp.ne.s32.totalorder %s222, %s224
      %p228 = scmp.eq.s32.totalorder %s27, 0
      %p229 = por %p227, %p228
      %p230 = scmp.ne.s32.totalorder %s222, %s224
      %p231 = scmp.eq.s32.totalorder %s32, 1
      %p232 = por %p230, %p231
      %p233 = scmp.ne.s32.totalorder %s224, %s225
      %p234 = scmp.eq.s32.totalorder %s32, 0
      %p235 = por %p233, %p234
      %p236 = scmp.ne.s32.totalorder %s224, %s225
      %p237 = scmp.eq.s32.totalorder %s33, 1
      %p238 = por %p236, %p237
      %p240 = scmp.ne.s32.totalorder %s225, %s239
      %p241 = scmp.eq.s32.totalorder %s33, 0
      %p242 = por %p240, %p241
      %s243 = ssub.s32 %s34, %s46
      %s244 = ssub.s32 %s35, %s42
      %s245 = sor.u32 %s243, %s244
      %p246 = scmp.eq.s32.totalorder %s245, 0
      %s248 = sadd.s32 %s247, 1
      %s249 = scalar_select %p246, %s247, %s248
      %p252 = pneg %p246
      %p253 = scmp.eq.s32.totalorder %s27, 1
      %p254 = por %p252, %p253
      %p255 = scmp.ne.s32.totalorder %s247, %s250
      %p256 = scmp.eq.s32.totalorder %s27, 0
      %p257 = por %p255, %p256
      %p258 = scmp.ne.s32.totalorder %s247, %s250
      %p259 = scmp.eq.s32.totalorder %s32, 1
      %p260 = por %p258, %p259
      %p261 = scmp.ne.s32.totalorder %s250, %s251
      %p262 = scmp.eq.s32.totalorder %s32, 0
      %p263 = por %p261, %p262
      %p264 = scmp.ne.s32.totalorder %s250, %s251
      %p265 = scmp.eq.s32.totalorder %s33, 1
      %p266 = por %p264, %p265
      %p268 = scmp.ne.s32.totalorder %s251, %s267
      %p269 = scmp.eq.s32.totalorder %s33, 0
      %p270 = por %p268, %p269
      %s271 = ssub.s32 %s34, %s46
      %s272 = ssub.s32 %s35, %s42
      %s273 = sor.u32 %s271, %s272
      %p274 = scmp.eq.s32.totalorder %s273, 0
      %s276 = sadd.s32 %s275, 1
      %s277 = scalar_select %p274, %s275, %s276
      %p280 = pneg %p274
      %p281 = scmp.eq.s32.totalorder %s27, 1
      %p282 = por %p280, %p281
      %p283 = scmp.ne.s32.totalorder %s275, %s278
      %p284 = scmp.eq.s32.totalorder %s27, 0
      %p285 = por %p283, %p284
      %p286 = scmp.ne.s32.totalorder %s275, %s278
      %p287 = scmp.eq.s32.totalorder %s32, 1
      %p288 = por %p286, %p287
      %p289 = scmp.ne.s32.totalorder %s278, %s279
      %p290 = scmp.eq.s32.totalorder %s32, 0
      %p291 = por %p289, %p290
      %p292 = scmp.ne.s32.totalorder %s278, %s279
      %p293 = scmp.eq.s32.totalorder %s33, 1
      %p294 = por %p292, %p293
      %p296 = scmp.ne.s32.totalorder %s279, %s295
      %p297 = scmp.eq.s32.totalorder %s33, 0
      %p298 = por %p296, %p297
      %s299 = ssub.s32 %s34, %s46
      %s300 = ssub.s32 %s35, %s42
      %s301 = sor.u32 %s299, %s300
      %p302 = scmp.eq.s32.totalorder %s301, 0
      %s304 = sadd.s32 %s303, 1
      %s305 = scalar_select %p302, %s303, %s304
      %p308 = pneg %p302
      %p309 = scmp.eq.s32.totalorder %s27, 1
      %p310 = por %p308, %p309
      %p311 = scmp.ne.s32.totalorder %s303, %s306
      %p312 = scmp.eq.s32.totalorder %s27, 0
      %p313 = por %p311, %p312
      %p314 = scmp.ne.s32.totalorder %s303, %s306
      %p315 = scmp.eq.s32.totalorder %s32, 1
      %p316 = por %p314, %p315
      %p317 = scmp.ne.s32.totalorder %s306, %s307
      %p318 = scmp.eq.s32.totalorder %s32, 0
      %p319 = por %p317, %p318
      %p320 = scmp.ne.s32.totalorder %s306, %s307
      %p321 = scmp.eq.s32.totalorder %s33, 1
      %p322 = por %p320, %p321
      %p324 = scmp.ne.s32.totalorder %s307, %s323
      %p325 = scmp.eq.s32.totalorder %s33, 0
      %p326 = por %p324, %p325
      %p327 = scmp.le.s32.totalorder 1, %s27
      %p328 = scmp.lt.s32.totalorder %s27, 3
      %p329 = pnand %p327, %p328
      %p330 = pneg %p329
      // Predicated region
      $region9: #{tpu_custom_call.1} parent=5 // pred_check
        _
      $region10: #{tpu_custom_call.1} parent=5 // pred_check_branch
        %332 = sbr.rel (%p329) target = $region12
      $region11: #{tpu_custom_call.1} parent=5 // pred_region
        %s333 = ssub.s32 %s27, 1
        // Predicated region
        $region13: #{tpu_custom_call.1} parent=11 // pred_check
          %p334 = pneg %p172
        $region14: #{tpu_custom_call.1} parent=11 // pred_check_branch
          %336 = sbr.rel (%p334) target = $region16
        $region15: #{tpu_custom_call.1} parent=11 // pred_region
          %s338 = ssub.s32 256, 256
          %339 = vsyncadd [#allocation8], %s338
          %s340 = sshll.u32 [#allocation9], 4
          %s341 = int_to_ptr.vmem [resolvable:$true] %s340
          %346 = dma.hbm_to_vmem [thread:$0]  %s4, 256, %s341, [#allocation8], 64, 64, 4
        $region16: #{tpu_custom_call.1} parent=11 // pred_fallthru
          _
        // Predicated region
        $region17: #{tpu_custom_call.1} parent=11 // pred_check
          %p347 = pneg %p193
        $region18: #{tpu_custom_call.1} parent=11 // pred_check_branch
          %349 = sbr.rel (%p347) target = $region20
        $region19: #{tpu_custom_call.1} parent=11 // pred_region
          _
        $region20: #{tpu_custom_call.1} parent=11 // pred_fallthru
          _
        // Predicated region
        $region21: #{tpu_custom_call.1} parent=11 // pred_check
          %p350 = pneg %p214
        $region22: #{tpu_custom_call.1} parent=11 // pred_check_branch
          %352 = sbr.rel (%p350) target = $region24
        $region23: #{tpu_custom_call.1} parent=11 // pred_region
          %s354 = ssub.s32 256, 256
          %355 = vsyncadd [#allocation11], %s354
          %s356 = sshll.u32 [#allocation10], 4
          %s357 = int_to_ptr.vmem [resolvable:$true] %s356
          %362 = dma.hbm_to_vmem [thread:$0]  %s6, 256, %s357, [#allocation11], 64, 64, 4
        $region24: #{tpu_custom_call.1} parent=11 // pred_fallthru
          _
        // Predicated region
        $region25: #{tpu_custom_call.1} parent=11 // pred_check
          %p363 = pneg %p235
        $region26: #{tpu_custom_call.1} parent=11 // pred_check_branch
          %365 = sbr.rel (%p363) target = $region28
        $region27: #{tpu_custom_call.1} parent=11 // pred_region
          %s367 = ssub.s32 256, 256
          %368 = vsyncadd [#allocation11], %s367
          %s369 = sshll.u32 [#allocation12], 4
          %s370 = int_to_ptr.vmem [resolvable:$true] %s369
          %375 = dma.hbm_to_vmem [thread:$0]  %s7, 256, %s370, [#allocation11], 64, 64, 4
        $region28: #{tpu_custom_call.1} parent=11 // pred_fallthru
          _
      $region12: #{tpu_custom_call.1} parent=5 // pred_fallthru
        _
      %p376 = scmp.lt.s32.totalorder %s27, 2
      // Predicated region
      $region29: #{tpu_custom_call.1} parent=5 // pred_check
        %p377 = pneg %p376
      $region30: #{tpu_custom_call.1} parent=5 // pred_check_branch
        %379 = sbr.rel (%p377) target = $region32
      $region31: #{tpu_custom_call.1} parent=5 // pred_region
        // Predicated region
        $region33: #{tpu_custom_call.1} parent=31 // pred_check
          %p380 = pneg %p61
        $region34: #{tpu_custom_call.1} parent=31 // pred_check_branch
          %382 = sbr.rel (%p380) target = $region36
        $region35: #{tpu_custom_call.1} parent=31 // pred_region
          %s383 = sand.u32 %s51, 1
          %s384 = scalar_lea.sflag [#allocation3], %s383
          %s385 = sand.u32 %s51, 1
          %s386 = smul.addr %s385, 32
          %s387 = scalar_lea.vmem [#allocation2], %s386
          %s388 = smul.u32 4, %s35
          %s390 = ssub.s32 512, 512
          %391 = vsyncadd %s384, %s390
          %s392 = smul.addr %s34, 4
          %s393 = sadd.s32 %s388, %s392
          %s394 = smul.addr %s393, 128
          %s395 = scalar_lea.hbm %s0, %s394
          %s396 = sshll.u32 %s387, 4
          %s397 = int_to_ptr.vmem [resolvable:$true] %s396
          %402 = dma.hbm_to_vmem [thread:$0]  %s395, 512, %s397, %s384, 128, 128, 8
        $region36: #{tpu_custom_call.1} parent=31 // pred_fallthru
          _
        // Predicated region
        $region37: #{tpu_custom_call.1} parent=31 // pred_check
          %p403 = pneg %p89
        $region38: #{tpu_custom_call.1} parent=31 // pred_check_branch
          %405 = sbr.rel (%p403) target = $region40
        $region39: #{tpu_custom_call.1} parent=31 // pred_region
          %s406 = sand.u32 %s27, 1
          %s407 = scalar_lea.sflag [#allocation5], %s406
          %s408 = sand.u32 %s79, 1
          %s409 = smul.addr %s408, 32
          %s410 = scalar_lea.vmem [#allocation4], %s409
          %s411 = smul.u32 4, %s35
          %s413 = ssub.s32 512, 512
          %414 = vsyncadd %s407, %s413
          %s415 = smul.addr %s34, 4
          %s416 = sadd.s32 %s411, %s415
          %s417 = smul.addr %s416, 128
          %s418 = scalar_lea.hbm %s1, %s417
          %s419 = sshll.u32 %s410, 4
          %s420 = int_to_ptr.vmem [resolvable:$true] %s419
          %425 = dma.hbm_to_vmem [thread:$0]  %s418, 512, %s420, %s407, 128, 128, 8
        $region40: #{tpu_custom_call.1} parent=31 // pred_fallthru
          _
        // Predicated region
        $region41: #{tpu_custom_call.1} parent=31 // pred_check
          %p426 = pneg %p117
        $region42: #{tpu_custom_call.1} parent=31 // pred_check_branch
          %428 = sbr.rel (%p426) target = $region44
        $region43: #{tpu_custom_call.1} parent=31 // pred_region
          %s429 = sand.u32 %s27, 1
          %s430 = scalar_lea.sflag [#allocation5], %s429
          %s431 = sand.u32 %s107, 1
          %s432 = smul.addr %s431, 32
          %s433 = scalar_lea.vmem [#allocation6], %s432
          %s434 = smul.u32 4, %s35
          %s436 = ssub.s32 512, 512
          %437 = vsyncadd %s430, %s436
          %s438 = smul.addr %s34, 4
          %s439 = sadd.s32 %s434, %s438
          %s440 = smul.addr %s439, 128
          %s441 = scalar_lea.hbm %s2, %s440
          %s442 = sshll.u32 %s433, 4
          %s443 = int_to_ptr.vmem [resolvable:$true] %s442
          %448 = dma.hbm_to_vmem [thread:$0]  %s441, 512, %s443, %s430, 128, 128, 8
        $region44: #{tpu_custom_call.1} parent=31 // pred_fallthru
          _
        // Predicated region
        $region45: #{tpu_custom_call.1} parent=31 // pred_check
          %p449 = pneg %p145
        $region46: #{tpu_custom_call.1} parent=31 // pred_check_branch
          %451 = sbr.rel (%p449) target = $region48
        $region47: #{tpu_custom_call.1} parent=31 // pred_region
          %s452 = sand.u32 %s27, 1
          %s453 = scalar_lea.sflag [#allocation8], %s452
          %s454 = sand.u32 %s135, 1
          %s455 = smul.addr %s454, 32
          %s456 = scalar_lea.vmem [#allocation7], %s455
          %s457 = smul.u32 4, %s35
          %s459 = ssub.s32 512, 512
          %460 = vsyncadd %s453, %s459
          %s461 = smul.addr %s34, 4
          %s462 = sadd.s32 %s457, %s461
          %s463 = smul.addr %s462, 128
          %s464 = scalar_lea.hbm %s3, %s463
          %s465 = sshll.u32 %s456, 4
          %s466 = int_to_ptr.vmem [resolvable:$true] %s465
          %471 = dma.hbm_to_vmem [thread:$0]  %s464, 512, %s466, %s453, 128, 128, 8
        $region48: #{tpu_custom_call.1} parent=31 // pred_fallthru
          _
      $region32: #{tpu_custom_call.1} parent=5 // pred_fallthru
        _
      %p472 = scmp.le.s32.totalorder 1, %s27
      %p473 = scmp.lt.s32.totalorder %s27, 3
      %p474 = pnand %p472, %p473
      %p475 = pneg %p474
      // Predicated region
      $region49: #{tpu_custom_call.1} parent=5 // pred_check
        _
      $region50: #{tpu_custom_call.1} parent=5 // pred_check_branch
        %477 = sbr.rel (%p474) target = $region52
      $region51: #{tpu_custom_call.1} parent=5 // pred_region
        %s478 = ssub.s32 %s27, 1
        %s479 = sand.u32 %s54, 1
        %s480 = scalar_lea.sflag [#allocation3], %s479
        %s481 = sand.u32 %s54, 1
        %s482 = smul.addr %s481, 32
        %s483 = scalar_lea.vmem [#allocation2], %s482
        // Predicated region
        $region53: #{tpu_custom_call.1} parent=51 // pred_check
          %p484 = pneg %p67
        $region54: #{tpu_custom_call.1} parent=51 // pred_check_branch
          %486 = sbr.rel (%p484) target = $region56
        $region55: #{tpu_custom_call.1} parent=51 // pred_region
          %487 = dma.done %s480, 512
        $region56: #{tpu_custom_call.1} parent=51 // pred_fallthru
          _
        %s488 = sand.u32 %s32, 1
        %s489 = scalar_lea.sflag [#allocation5], %s488
        %s490 = sand.u32 %s82, 1
        %s491 = smul.addr %s490, 32
        %s492 = scalar_lea.vmem [#allocation4], %s491
        // Predicated region
        $region57: #{tpu_custom_call.1} parent=51 // pred_check
          %p493 = pneg %p95
        $region58: #{tpu_custom_call.1} parent=51 // pred_check_branch
          %495 = sbr.rel (%p493) target = $region60
        $region59: #{tpu_custom_call.1} parent=51 // pred_region
          %496 = dma.done %s489, 512
        $region60: #{tpu_custom_call.1} parent=51 // pred_fallthru
          _
        %s497 = sand.u32 %s32, 1
        %s498 = scalar_lea.sflag [#allocation5], %s497
        %s499 = sand.u32 %s110, 1
        %s500 = smul.addr %s499, 32
        %s501 = scalar_lea.vmem [#allocation6], %s500
        // Predicated region
        $region61: #{tpu_custom_call.1} parent=51 // pred_check
          %p502 = pneg %p123
        $region62: #{tpu_custom_call.1} parent=51 // pred_check_branch
          %504 = sbr.rel (%p502) target = $region64
        $region63: #{tpu_custom_call.1} parent=51 // pred_region
          %505 = dma.done %s498, 512
        $region64: #{tpu_custom_call.1} parent=51 // pred_fallthru
          _
        %s506 = sand.u32 %s32, 1
        %s507 = scalar_lea.sflag [#allocation8], %s506
        %s508 = sand.u32 %s138, 1
        %s509 = smul.addr %s508, 32
        %s510 = scalar_lea.vmem [#allocation7], %s509
        // Predicated region
        $region65: #{tpu_custom_call.1} parent=51 // pred_check
          %p511 = pneg %p151
        $region66: #{tpu_custom_call.1} parent=51 // pred_check_branch
          %513 = sbr.rel (%p511) target = $region68
        $region67: #{tpu_custom_call.1} parent=51 // pred_region
          %514 = dma.done %s507, 512
        $region68: #{tpu_custom_call.1} parent=51 // pred_fallthru
          _
        // Predicated region
        $region69: #{tpu_custom_call.1} parent=51 // pred_check
          %p515 = pneg %p172
        $region70: #{tpu_custom_call.1} parent=51 // pred_check_branch
          %517 = sbr.rel (%p515) target = $region72
        $region71: #{tpu_custom_call.1} parent=51 // pred_region
          %518 = dma.done [#allocation8], 256
        $region72: #{tpu_custom_call.1} parent=51 // pred_fallthru
          _
        // Predicated region
        $region73: #{tpu_custom_call.1} parent=51 // pred_check
          %p519 = pneg %p214
        $region74: #{tpu_custom_call.1} parent=51 // pred_check_branch
          %521 = sbr.rel (%p519) target = $region76
        $region75: #{tpu_custom_call.1} parent=51 // pred_region
          %522 = dma.done [#allocation11], 256
        $region76: #{tpu_custom_call.1} parent=51 // pred_fallthru
          _
        // Predicated region
        $region77: #{tpu_custom_call.1} parent=51 // pred_check
          %p523 = pneg %p235
        $region78: #{tpu_custom_call.1} parent=51 // pred_check_branch
          %525 = sbr.rel (%p523) target = $region80
        $region79: #{tpu_custom_call.1} parent=51 // pred_region
          %526 = dma.done [#allocation11], 256
        $region80: #{tpu_custom_call.1} parent=51 // pred_fallthru
          _
        %s527 = sand.u32 %s54, 1
        %s528 = scalar_lea.sflag [#allocation3], %s527
        %s529 = sand.u32 %s54, 1
        %s530 = smul.addr %s529, 32
        %s531 = scalar_lea.vmem [#allocation2], %s530
        %p532 = pneg %p67
        %p533 = pneg %p64
        %s534 = sand.u32 %s32, 1
        %s535 = scalar_lea.sflag [#allocation5], %s534
        %s536 = sand.u32 %s82, 1
        %s537 = smul.addr %s536, 32
        %s538 = scalar_lea.vmem [#allocation4], %s537
        %p539 = pneg %p95
        %p540 = pneg %p92
        %s541 = sand.u32 %s32, 1
        %s542 = scalar_lea.sflag [#allocation5], %s541
        %s543 = sand.u32 %s110, 1
        %s544 = smul.addr %s543, 32
        %s545 = scalar_lea.vmem [#allocation6], %s544
        %p546 = pneg %p123
        %p547 = pneg %p120
        %s548 = sand.u32 %s32, 1
        %s549 = scalar_lea.sflag [#allocation8], %s548
        %s550 = sand.u32 %s138, 1
        %s551 = smul.addr %s550, 32
        %s552 = scalar_lea.vmem [#allocation7], %s551
        %p553 = pneg %p151
        %p554 = pneg %p148
        %p555 = pneg %p172
        %p556 = pneg %p169
        %p557 = pneg %p193
        %p558 = pneg %p190
        %p559 = pneg %p214
        %p560 = pneg %p211
        %p561 = pneg %p235
        %p562 = pneg %p232
        %p563 = pneg %p263
        %p564 = pneg %p260
        %s565 = smul.u32 4, %s37
        %p566 = scmp.lt.s32.totalorder %s36, 1
        %s567 = scalar_select %p566, %s36, 1
        %p568 = scmp.lt.s32.totalorder %s565, 3
        %s569 = scalar_select %p568, %s565, 3
        %s570 = smul.addr %s567, 8
        %s571 = sadd.s32 %s569, %s570
        %s572 = smul.addr %s571, 4
        %s573 = scalar_lea.vmem %s8, %s572
        %p574 = pneg %p291
        %p575 = pneg %p288
        %s576 = smul.u32 4, %s37
        %p577 = scmp.lt.s32.totalorder %s36, 1
        %s578 = scalar_select %p577, %s36, 1
        %p579 = scmp.lt.s32.totalorder %s576, 3
        %s580 = scalar_select %p579, %s576, 3
        %s581 = smul.addr %s578, 8
        %s582 = sadd.s32 %s580, %s581
        %s583 = smul.addr %s582, 4
        %s584 = scalar_lea.vmem %s9, %s583
        %p585 = pneg %p319
        %p586 = pneg %p316
        %s587 = smul.u32 4, %s37
        %p588 = scmp.lt.s32.totalorder %s36, 1
        %s589 = scalar_select %p588, %s36, 1
        %p590 = scmp.lt.s32.totalorder %s587, 3
        %s591 = scalar_select %p590, %s587, 3
        %s592 = smul.addr %s589, 8
        %s593 = sadd.s32 %s591, %s592
        %s594 = smul.addr %s593, 4
        %s595 = scalar_lea.vmem %s10, %s594
        %s596 = smul.u32 4, %s37
        %s597 = smul.u32 4, %s37
        %s598 = smul.u32 4, %s37
        %s599 = smul.u32 4, %s37
        %s600 = smul.u32 4, %s37
        %p601 = scmp.lt.s32.totalorder %s36, 1
        %s602 = scalar_select %p601, %s36, 1
        %p603 = scmp.lt.s32.totalorder %s600, 3
        %s604 = scalar_select %p603, %s600, 3
        %s605 = smul.addr %s602, 8
        %s606 = sadd.s32 %s604, %s605
        %s607 = smul.addr %s606, 4
        %s608 = scalar_lea.vmem %s8, %s607
        %s609 = smul.u32 4, %s37
        %s610 = smul.u32 4, %s37
        %p611 = scmp.lt.s32.totalorder %s36, 1
        %s612 = scalar_select %p611, %s36, 1
        %p613 = scmp.lt.s32.totalorder %s610, 3
        %s614 = scalar_select %p613, %s610, 3
        %s615 = smul.addr %s612, 8
        %s616 = sadd.s32 %s614, %s615
        %s617 = smul.addr %s616, 4
        %s618 = scalar_lea.vmem %s9, %s617
        %s619 = smul.u32 4, %s37
        %s620 = smul.u32 4, %s37
        %p621 = scmp.lt.s32.totalorder %s36, 1
        %s622 = scalar_select %p621, %s36, 1
        %p623 = scmp.lt.s32.totalorder %s620, 3
        %s624 = scalar_select %p623, %s620, 3
        %s625 = smul.addr %s622, 8
        %s626 = sadd.s32 %s624, %s625
        %s627 = smul.addr %s626, 4
        %s628 = scalar_lea.vmem %s10, %s627
        %s629 = smul.u32 4, %s37
        %v631 = vld [vmem:[%s483] sm:$0xff]
        %v632 = vld [vmem:[%s483 + $0x8] sm:$0xff]
        %v633 = vld [vmem:[%s483 + $0x10] sm:$0xff]
        %v634 = vld [vmem:[%s483 + $0x18] sm:$0xff]
        %v635 = vpack.c.bf16 %v632, %v631
        %v636 = vpack.c.bf16 %v634, %v633
        %v637 = vld [vmem:[%s492] sm:$0xff]
        %v638 = vld [vmem:[%s492 + $0x8] sm:$0xff]
        %v639 = vld [vmem:[%s492 + $0x10] sm:$0xff]
        %v640 = vld [vmem:[%s492 + $0x18] sm:$0xff]
        %v641 = vpack.c.bf16 %v638, %v637
        %v642 = vpack.c.bf16 %v640, %v639
        %v643 = vld [vmem:[%s501] sm:$0xff]
        %v644 = vld [vmem:[%s501 + $0x8] sm:$0xff]
        %v645 = vld [vmem:[%s501 + $0x10] sm:$0xff]
        %v646 = vld [vmem:[%s501 + $0x18] sm:$0xff]
        %v647 = vpack.c.bf16 %v644, %v643
        %v648 = vpack.c.bf16 %v646, %v645
        %v649 = vld [vmem:[%s510] sm:$0xff]
        %v650 = vld [vmem:[%s510 + $0x8] sm:$0xff]
        %v651 = vld [vmem:[%s510 + $0x10] sm:$0xff]
        %v652 = vld [vmem:[%s510 + $0x18] sm:$0xff]
        %v653 = vpack.c.bf16 %v650, %v649
        %v654 = vpack.c.bf16 %v652, %v651
        %v655 = vld [vmem:[#allocation12] sm:$0xf]
        %v656 = vld [vmem:[#allocation12 + $0x4] sm:$0xf]
        %v657 = vld [vmem:[#allocation12 + $0x8] sm:$0xf]
        %v658 = vld [vmem:[#allocation12 + $0xc] sm:$0xf]
        %v663 = vunpack.c.l.b16 %v655
        %v664 = vunpack.c.l.b16 %v656
        %v665 = vunpack.c.l.b16 %v657
        %v666 = vunpack.c.l.b16 %v658
        %v667 = vpack.c.b16 %v664, %v663
        %v668 = vpack.c.b16 %v666, %v665
        %vm671 = vcmask 261120
        %v673 = vsel %vm671, %v653, 0
        %v676 = vsel %vm671, %v654, 0
        %678 = vmatprep.subr.bf16.mxu0 0
        %679 = vmatpush1.bf16.msra.mxu0 %v667
        %680 = vmatprep.subr.bf16.mxu0 0
        %681 = vmatpush1.bf16.msra.mxu0 %v668
        %682 = vmatprep.subr.bf16.mxu0 0
        %683 = vmatpush1.bf16.msra.mxu0 0
        %684 = vmatprep.subr.bf16.mxu0 0
        %685 = vmatpush1.bf16.msra.mxu0 0
        %686 = vmatprep.subr.bf16.mxu0 0
        %687 = vmatpush1.bf16.msra.mxu0 0
        %688 = vmatprep.subr.bf16.mxu0 0
        %689 = vmatpush1.bf16.msra.mxu0 0
        %690 = vmatprep.subr.bf16.mxu0 0
        %691 = vmatpush1.bf16.msra.mxu0 0
        %692 = vmatprep.subr.bf16.mxu0 0
        %693 = vmatpush1.bf16.msra.mxu0 0
        %694 = vmatprep.subr.bf16.mxu0 0
        %695 = vmatpush1.bf16.msra.mxu0 0
        %696 = vmatprep.subr.bf16.mxu0 0
        %697 = vmatpush1.bf16.msra.mxu0 0
        %698 = vmatprep.subr.bf16.mxu0 0
        %699 = vmatpush1.bf16.msra.mxu0 0
        %700 = vmatprep.subr.bf16.mxu0 0
        %701 = vmatpush1.bf16.msra.mxu0 0
        %702 = vmatprep.subr.bf16.mxu0 0
        %703 = vmatpush1.bf16.msra.mxu0 0
        %704 = vmatprep.subr.bf16.mxu0 0
        %705 = vmatpush1.bf16.msra.mxu0 0
        %706 = vmatprep.subr.bf16.mxu0 0
        %707 = vmatpush1.bf16.msra.mxu0 0
        %708 = vmatprep.subr.bf16.mxu0 0
        %709 = vmatpush1.bf16.msra.mxu0 0
        %710 = vmatprep.mubr.bf16.mxu0 0
        %711 = vmatmul.mubr.bf16.gmra.mrb[0].mxu0 %v673
        %v712 = vpop.f32.mrb[0].mxu0
        %v713 = vadd.f32 0.0, %v712
        %v714 = vpop.f32.mrb[0].mxu0
        %v715 = vpop.f32.mrb[0].mxu0
        %v716 = vadd.f32 0.0, %v715
        %v717 = vpop.f32.mrb[0].mxu0
        %718 = vmatprep.mubr.bf16.mxu0 0
        %719 = vmatmul.mubr.bf16.gmra.mrb[0].mxu0 %v676
        %v720 = vpop.f32.mrb[0].mxu0
        %v721 = vadd.f32 0.0, %v720
        %v722 = vpop.f32.mrb[0].mxu0
        %v723 = vpop.f32.mrb[0].mxu0
        %v724 = vadd.f32 0.0, %v723
        %v725 = vpop.f32.mrb[0].mxu0
        %726 = vdwg.mxu0
        %v727 = vld [vmem:[#allocation9] sm:$0xf]
        %v728 = vld [vmem:[#allocation9 + $0x4] sm:$0xf]
        %v729 = vld [vmem:[#allocation9 + $0x8] sm:$0xf]
        %v730 = vld [vmem:[#allocation9 + $0xc] sm:$0xf]
        %v735 = vunpack.c.l.b16 %v727
        %v736 = vunpack.c.l.b16 %v728
        %v737 = vunpack.c.l.b16 %v729
        %v738 = vunpack.c.l.b16 %v730
        %v739 = vpack.c.b16 %v736, %v735
        %v740 = vpack.c.b16 %v738, %v737
        %v744 = vsel %vm671, %v635, 0
        %v747 = vsel %vm671, %v636, 0
        %749 = vmatprep.subr.bf16.mxu0 0
        %750 = vmatpush1.bf16.msra.mxu0 %v739
        %751 = vmatprep.subr.bf16.mxu0 0
        %752 = vmatpush1.bf16.msra.mxu0 %v740
        %753 = vmatprep.subr.bf16.mxu0 0
        %754 = vmatpush1.bf16.msra.mxu0 0
        %755 = vmatprep.subr.bf16.mxu0 0
        %756 = vmatpush1.bf16.msra.mxu0 0
        %757 = vmatprep.subr.bf16.mxu0 0
        %758 = vmatpush1.bf16.msra.mxu0 0
        %759 = vmatprep.subr.bf16.mxu0 0
        %760 = vmatpush1.bf16.msra.mxu0 0
        %761 = vmatprep.subr.bf16.mxu0 0
        %762 = vmatpush1.bf16.msra.mxu0 0
        %763 = vmatprep.subr.bf16.mxu0 0
        %764 = vmatpush1.bf16.msra.mxu0 0
        %765 = vmatprep.subr.bf16.mxu0 0
        %766 = vmatpush1.bf16.msra.mxu0 0
        %767 = vmatprep.subr.bf16.mxu0 0
        %768 = vmatpush1.bf16.msra.mxu0 0
        %769 = vmatprep.subr.bf16.mxu0 0
        %770 = vmatpush1.bf16.msra.mxu0 0
        %771 = vmatprep.subr.bf16.mxu0 0
        %772 = vmatpush1.bf16.msra.mxu0 0
        %773 = vmatprep.subr.bf16.mxu0 0
        %774 = vmatpush1.bf16.msra.mxu0 0
        %775 = vmatprep.subr.bf16.mxu0 0
        %776 = vmatpush1.bf16.msra.mxu0 0
        %777 = vmatprep.subr.bf16.mxu0 0
        %778 = vmatpush1.bf16.msra.mxu0 0
        %779 = vmatprep.subr.bf16.mxu0 0
        %780 = vmatpush1.bf16.msra.mxu0 0
        %781 = vmatprep.mubr.bf16.mxu0 0
        %782 = vmatmul.mubr.bf16.gmra.mrb[0].mxu0 %v744
        %v783 = vpop.f32.mrb[0].mxu0
        %v784 = vadd.f32 0.0, %v783
        %v785 = vpop.f32.mrb[0].mxu0
        %v786 = vpop.f32.mrb[0].mxu0
        %v787 = vadd.f32 0.0, %v786
        %v788 = vpop.f32.mrb[0].mxu0
        %789 = vmatprep.mubr.bf16.mxu0 0
        %790 = vmatmul.mubr.bf16.gmra.mrb[0].mxu0 %v747
        %v791 = vpop.f32.mrb[0].mxu0
        %v792 = vadd.f32 0.0, %v791
        %v793 = vpop.f32.mrb[0].mxu0
        %v794 = vpop.f32.mrb[0].mxu0
        %v795 = vadd.f32 0.0, %v794
        %v796 = vpop.f32.mrb[0].mxu0
        %797 = vdwg.mxu0
        %v798 = vmul.f32 %v784, %v713
        %v799 = vmul.f32 %v787, %v716
        %v800 = vmul.f32 %v792, %v721
        %v801 = vmul.f32 %v795, %v724
        %v802 = vmul.f32 %v798, 0.25
        %v803 = vmul.f32 %v799, 0.25
        %v804 = vmul.f32 %v800, 0.25
        %v805 = vmul.f32 %v801, 0.25
        %v806 = vld [vmem:[%s5] sm:$0xf]
        %v807 = vld [vmem:[%s5 + $0x4] sm:$0xf]
        %v808 = vld [vmem:[%s5 + $0x8] sm:$0xf]
        %v809 = vld [vmem:[%s5 + $0xc] sm:$0xf]
        %v814 = vunpack.c.l.b16 %v806
        %v815 = vunpack.c.l.b16 %v807
        %v816 = vunpack.c.l.b16 %v808
        %v817 = vunpack.c.l.b16 %v809
        %v818 = vpack.c.b16 %v815, %v814
        %v819 = vpack.c.b16 %v817, %v816
        %v823 = vsel %vm671, %v641, 0
        %v826 = vsel %vm671, %v642, 0
        %828 = vmatprep.subr.bf16.mxu0 0
        %829 = vmatpush1.bf16.msra.mxu0 %v818
        %830 = vmatprep.subr.bf16.mxu0 0
        %831 = vmatpush1.bf16.msra.mxu0 %v819
        %832 = vmatprep.subr.bf16.mxu0 0
        %833 = vmatpush1.bf16.msra.mxu0 0
        %834 = vmatprep.subr.bf16.mxu0 0
        %835 = vmatpush1.bf16.msra.mxu0 0
        %836 = vmatprep.subr.bf16.mxu0 0
        %837 = vmatpush1.bf16.msra.mxu0 0
        %838 = vmatprep.subr.bf16.mxu0 0
        %839 = vmatpush1.bf16.msra.mxu0 0
        %840 = vmatprep.subr.bf16.mxu0 0
        %841 = vmatpush1.bf16.msra.mxu0 0
        %842 = vmatprep.subr.bf16.mxu0 0
        %843 = vmatpush1.bf16.msra.mxu0 0
        %844 = vmatprep.subr.bf16.mxu0 0
        %845 = vmatpush1.bf16.msra.mxu0 0
        %846 = vmatprep.subr.bf16.mxu0 0
        %847 = vmatpush1.bf16.msra.mxu0 0
        %848 = vmatprep.subr.bf16.mxu0 0
        %849 = vmatpush1.bf16.msra.mxu0 0
        %850 = vmatprep.subr.bf16.mxu0 0
        %851 = vmatpush1.bf16.msra.mxu0 0
        %852 = vmatprep.subr.bf16.mxu0 0
        %853 = vmatpush1.bf16.msra.mxu0 0
        %854 = vmatprep.subr.bf16.mxu0 0
        %855 = vmatpush1.bf16.msra.mxu0 0
        %856 = vmatprep.subr.bf16.mxu0 0
        %857 = vmatpush1.bf16.msra.mxu0 0
        %858 = vmatprep.subr.bf16.mxu0 0
        %859 = vmatpush1.bf16.msra.mxu0 0
        %860 = vmatprep.mubr.bf16.mxu0 0
        %861 = vmatmul.mubr.bf16.gmra.mrb[0].mxu0 %v823
        %v862 = vpop.f32.mrb[0].mxu0
        %v863 = vadd.f32 0.0, %v862
        %v864 = vpop.f32.mrb[0].mxu0
        %v865 = vpop.f32.mrb[0].mxu0
        %v866 = vadd.f32 0.0, %v865
        %v867 = vpop.f32.mrb[0].mxu0
        %868 = vmatprep.mubr.bf16.mxu0 0
        %869 = vmatmul.mubr.bf16.gmra.mrb[0].mxu0 %v826
        %v870 = vpop.f32.mrb[0].mxu0
        %v871 = vadd.f32 0.0, %v870
        %v872 = vpop.f32.mrb[0].mxu0
        %v873 = vpop.f32.mrb[0].mxu0
        %v874 = vadd.f32 0.0, %v873
        %v875 = vpop.f32.mrb[0].mxu0
        %876 = vdwg.mxu0
        %881 = vrot.lane.b32.xlu0 %v713, 96
        %v882 = vpop.permute.xlu0 %881
        %883 = vrot.lane.b32.xlu0 %v716, 96
        %v884 = vpop.permute.xlu0 %883
        %885 = vrot.lane.b32.xlu0 %v721, 96
        %v886 = vpop.permute.xlu0 %885
        %887 = vrot.lane.b32.xlu0 %v724, 96
        %v888 = vpop.permute.xlu0 %887
        %v893 = vmul.f32 %v863, %v882
        %v894 = vmul.f32 %v866, %v884
        %v895 = vmul.f32 %v871, %v886
        %v896 = vmul.f32 %v874, %v888
        %v897 = vld [vmem:[#allocation10] sm:$0xf]
        %v898 = vld [vmem:[#allocation10 + $0x4] sm:$0xf]
        %v899 = vld [vmem:[#allocation10 + $0x8] sm:$0xf]
        %v900 = vld [vmem:[#allocation10 + $0xc] sm:$0xf]
        %v905 = vunpack.c.l.b16 %v897
        %v906 = vunpack.c.l.b16 %v898
        %v907 = vunpack.c.l.b16 %v899
        %v908 = vunpack.c.l.b16 %v900
        %v909 = vpack.c.b16 %v906, %v905
        %v910 = vpack.c.b16 %v908, %v907
        %v914 = vsel %vm671, %v647, 0
        %v917 = vsel %vm671, %v648, 0
        %919 = vmatprep.subr.bf16.mxu0 0
        %920 = vmatpush1.bf16.msra.mxu0 %v909
        %921 = vmatprep.subr.bf16.mxu0 0
        %922 = vmatpush1.bf16.msra.mxu0 %v910
        %923 = vmatprep.subr.bf16.mxu0 0
        %924 = vmatpush1.bf16.msra.mxu0 0
        %925 = vmatprep.subr.bf16.mxu0 0
        %926 = vmatpush1.bf16.msra.mxu0 0
        %927 = vmatprep.subr.bf16.mxu0 0
        %928 = vmatpush1.bf16.msra.mxu0 0
        %929 = vmatprep.subr.bf16.mxu0 0
        %930 = vmatpush1.bf16.msra.mxu0 0
        %931 = vmatprep.subr.bf16.mxu0 0
        %932 = vmatpush1.bf16.msra.mxu0 0
        %933 = vmatprep.subr.bf16.mxu0 0
        %934 = vmatpush1.bf16.msra.mxu0 0
        %935 = vmatprep.subr.bf16.mxu0 0
        %936 = vmatpush1.bf16.msra.mxu0 0
        %937 = vmatprep.subr.bf16.mxu0 0
        %938 = vmatpush1.bf16.msra.mxu0 0
        %939 = vmatprep.subr.bf16.mxu0 0
        %940 = vmatpush1.bf16.msra.mxu0 0
        %941 = vmatprep.subr.bf16.mxu0 0
        %942 = vmatpush1.bf16.msra.mxu0 0
        %943 = vmatprep.subr.bf16.mxu0 0
        %944 = vmatpush1.bf16.msra.mxu0 0
        %945 = vmatprep.subr.bf16.mxu0 0
        %946 = vmatpush1.bf16.msra.mxu0 0
        %947 = vmatprep.subr.bf16.mxu0 0
        %948 = vmatpush1.bf16.msra.mxu0 0
        %949 = vmatprep.subr.bf16.mxu0 0
        %950 = vmatpush1.bf16.msra.mxu0 0
        %951 = vmatprep.mubr.bf16.mxu0 0
        %952 = vmatmul.mubr.bf16.gmra.mrb[0].mxu0 %v914
        %v953 = vpop.f32.mrb[0].mxu0
        %v954 = vadd.f32 0.0, %v953
        %v955 = vpop.f32.mrb[0].mxu0
        %v956 = vpop.f32.mrb[0].mxu0
        %v957 = vadd.f32 0.0, %v956
        %v958 = vpop.f32.mrb[0].mxu0
        %959 = vmatprep.mubr.bf16.mxu0 0
        %960 = vmatmul.mubr.bf16.gmra.mrb[0].mxu0 %v917
        %v961 = vpop.f32.mrb[0].mxu0
        %v962 = vadd.f32 0.0, %v961
        %v963 = vpop.f32.mrb[0].mxu0
        %v964 = vpop.f32.mrb[0].mxu0
        %v965 = vadd.f32 0.0, %v964
        %v966 = vpop.f32.mrb[0].mxu0
        %967 = vdwg.mxu0
        %968 = vrot.lane.b32.xlu0 %v713, 64
        %v969 = vpop.permute.xlu0 %968
        %970 = vrot.lane.b32.xlu0 %v716, 64
        %v971 = vpop.permute.xlu0 %970
        %972 = vrot.lane.b32.xlu0 %v721, 64
        %v973 = vpop.permute.xlu0 %972
        %974 = vrot.lane.b32.xlu0 %v724, 64
        %v975 = vpop.permute.xlu0 %974
        %v980 = vmul.f32 %v954, %v969
        %v981 = vmul.f32 %v957, %v971
        %v982 = vmul.f32 %v962, %v973
        %v983 = vmul.f32 %v965, %v975
        %v984 = vpack.c.bf16 %v803, %v802
        %v985 = vpack.c.bf16 %v805, %v804
        %v988 = vunpack.c.l.b16 %v984
        %v989 = vunpack.c.h.b16 %v984
        %v990 = vunpack.c.l.b16 %v985
        %v991 = vunpack.c.h.b16 %v985
        %v992 = vpack.c.b16 %v988, %v988
        %v993 = vpack.c.b16 %v989, %v989
        %v994 = vpack.c.b16 %v990, %v990
        %v995 = vpack.c.b16 %v991, %v991
        %vm1000 = vcmask 125952
        %1001 = vst.msk [vmem:[%s608] sm:$0xf] %vm1000, %v992
        %1002 = vst.msk [vmem:[%s608 + $0x4] sm:$0xf] %vm1000, %v993
        %1003 = vst.msk [vmem:[%s608 + $0x8] sm:$0xf] %vm1000, %v994
        %1004 = vst.msk [vmem:[%s608 + $0xc] sm:$0xf] %vm1000, %v995
        %v1005 = vpack.c.bf16 %v894, %v893
        %v1006 = vpack.c.bf16 %v896, %v895
        %v1009 = vunpack.c.l.b16 %v1005
        %v1010 = vunpack.c.h.b16 %v1005
        %v1011 = vunpack.c.l.b16 %v1006
        %v1012 = vunpack.c.h.b16 %v1006
        %v1013 = vpack.c.b16 %v1009, %v1009
        %v1014 = vpack.c.b16 %v1010, %v1010
        %v1015 = vpack.c.b16 %v1011, %v1011
        %v1016 = vpack.c.b16 %v1012, %v1012
        %1021 = vst.msk [vmem:[%s618] sm:$0xf] %vm1000, %v1013
        %1022 = vst.msk [vmem:[%s618 + $0x4] sm:$0xf] %vm1000, %v1014
        %1023 = vst.msk [vmem:[%s618 + $0x8] sm:$0xf] %vm1000, %v1015
        %1024 = vst.msk [vmem:[%s618 + $0xc] sm:$0xf] %vm1000, %v1016
        %v1025 = vpack.c.bf16 %v981, %v980
        %v1026 = vpack.c.bf16 %v983, %v982
        %v1029 = vunpack.c.l.b16 %v1025
        %v1030 = vunpack.c.h.b16 %v1025
        %v1031 = vunpack.c.l.b16 %v1026
        %v1032 = vunpack.c.h.b16 %v1026
        %v1033 = vpack.c.b16 %v1029, %v1029
        %v1034 = vpack.c.b16 %v1030, %v1030
        %v1035 = vpack.c.b16 %v1031, %v1031
        %v1036 = vpack.c.b16 %v1032, %v1032
        %1041 = vst.msk [vmem:[%s628] sm:$0xf] %vm1000, %v1033
        %1042 = vst.msk [vmem:[%s628 + $0x4] sm:$0xf] %vm1000, %v1034
        %1043 = vst.msk [vmem:[%s628 + $0x8] sm:$0xf] %vm1000, %v1035
        %1044 = vst.msk [vmem:[%s628 + $0xc] sm:$0xf] %vm1000, %v1036
        %1045 = vrot.lane.b32.xlu0 %v992, 112
        %v1046 = vpop.permute.xlu0 %1045
        %1047 = vrot.lane.b32.xlu0 %v993, 112
        %v1048 = vpop.permute.xlu0 %1047
        %1049 = vrot.lane.b32.xlu0 %v994, 112
        %v1050 = vpop.permute.xlu0 %1049
        %1051 = vrot.lane.b32.xlu0 %v995, 112
        %v1052 = vpop.permute.xlu0 %1051
        %s1057 = scalar_lea.vmem %s608, 16
        %1058 = vst.msk [vmem:[%s1057] sm:$0xf] %vm1000, %v1046
        %1059 = vst.msk [vmem:[%s1057 + $0x4] sm:$0xf] %vm1000, %v1048
        %1060 = vst.msk [vmem:[%s1057 + $0x8] sm:$0xf] %vm1000, %v1050
        %1061 = vst.msk [vmem:[%s1057 + $0xc] sm:$0xf] %vm1000, %v1052
        %1062 = vrot.lane.b32.xlu0 %v1013, 112
        %v1063 = vpop.permute.xlu0 %1062
        %1064 = vrot.lane.b32.xlu0 %v1014, 112
        %v1065 = vpop.permute.xlu0 %1064
        %1066 = vrot.lane.b32.xlu0 %v1015, 112
        %v1067 = vpop.permute.xlu0 %1066
        %1068 = vrot.lane.b32.xlu0 %v1016, 112
        %v1069 = vpop.permute.xlu0 %1068
        %s1074 = scalar_lea.vmem %s618, 16
        %1075 = vst.msk [vmem:[%s1074] sm:$0xf] %vm1000, %v1063
        %1076 = vst.msk [vmem:[%s1074 + $0x4] sm:$0xf] %vm1000, %v1065
        %1077 = vst.msk [vmem:[%s1074 + $0x8] sm:$0xf] %vm1000, %v1067
        %1078 = vst.msk [vmem:[%s1074 + $0xc] sm:$0xf] %vm1000, %v1069
        %1079 = vrot.lane.b32.xlu0 %v1033, 112
        %v1080 = vpop.permute.xlu0 %1079
        %1081 = vrot.lane.b32.xlu0 %v1034, 112
        %v1082 = vpop.permute.xlu0 %1081
        %1083 = vrot.lane.b32.xlu0 %v1035, 112
        %v1084 = vpop.permute.xlu0 %1083
        %1085 = vrot.lane.b32.xlu0 %v1036, 112
        %v1086 = vpop.permute.xlu0 %1085
        %s1091 = scalar_lea.vmem %s628, 16
        %1092 = vst.msk [vmem:[%s1091] sm:$0xf] %vm1000, %v1080
        %1093 = vst.msk [vmem:[%s1091 + $0x4] sm:$0xf] %vm1000, %v1082
        %1094 = vst.msk [vmem:[%s1091 + $0x8] sm:$0xf] %vm1000, %v1084
        %1095 = vst.msk [vmem:[%s1091 + $0xc] sm:$0xf] %vm1000, %v1086
        %s1096 = smul.u32 4, %s37
        %p1097 = scmp.lt.s32.totalorder %s36, 1
        %s1098 = scalar_select %p1097, %s36, 1
        %p1099 = scmp.lt.s32.totalorder %s1096, 3
        %s1100 = scalar_select %p1099, %s1096, 3
        %s1101 = smul.addr %s1098, 8
        %s1102 = sadd.s32 %s1100, %s1101
        %s1103 = smul.addr %s1102, 4
        %s1104 = scalar_lea.vmem %s8, %s1103
        %s1105 = smul.u32 4, %s37
        %p1106 = scmp.lt.s32.totalorder %s36, 1
        %s1107 = scalar_select %p1106, %s36, 1
        %p1108 = scmp.lt.s32.totalorder %s1105, 3
        %s1109 = scalar_select %p1108, %s1105, 3
        %s1110 = smul.addr %s1107, 8
        %s1111 = sadd.s32 %s1109, %s1110
        %s1112 = smul.addr %s1111, 4
        %s1113 = scalar_lea.vmem %s9, %s1112
        %s1114 = smul.u32 4, %s37
        %p1115 = scmp.lt.s32.totalorder %s36, 1
        %s1116 = scalar_select %p1115, %s36, 1
        %p1117 = scmp.lt.s32.totalorder %s1114, 3
        %s1118 = scalar_select %p1117, %s1114, 3
        %s1119 = smul.addr %s1116, 8
        %s1120 = sadd.s32 %s1118, %s1119
        %s1121 = smul.addr %s1120, 4
        %s1122 = scalar_lea.vmem %s10, %s1121
        // Predicated region
        $region81: #{tpu_custom_call.1} parent=51 // pred_check
          %p1123 = pneg %p260
        $region82: #{tpu_custom_call.1} parent=51 // pred_check_branch
          %1125 = sbr.rel (%p1123) target = $region84
        $region83: #{tpu_custom_call.1} parent=51 // pred_region
          %s1126 = smul.u32 4, %s37
        $region84: #{tpu_custom_call.1} parent=51 // pred_fallthru
          _
        // Predicated region
        $region85: #{tpu_custom_call.1} parent=51 // pred_check
          %p1127 = pneg %p288
        $region86: #{tpu_custom_call.1} parent=51 // pred_check_branch
          %1129 = sbr.rel (%p1127) target = $region88
        $region87: #{tpu_custom_call.1} parent=51 // pred_region
          %s1130 = smul.u32 4, %s37
        $region88: #{tpu_custom_call.1} parent=51 // pred_fallthru
          _
        // Predicated region
        $region89: #{tpu_custom_call.1} parent=51 // pred_check
          %p1131 = pneg %p316
        $region90: #{tpu_custom_call.1} parent=51 // pred_check_branch
          %1133 = sbr.rel (%p1131) target = $region92
        $region91: #{tpu_custom_call.1} parent=51 // pred_region
          %s1134 = smul.u32 4, %s37
        $region92: #{tpu_custom_call.1} parent=51 // pred_fallthru
          _
      $region52: #{tpu_custom_call.1} parent=5 // pred_fallthru
        _
      %p1135 = scmp.le.s32.totalorder 2, %s27
      // Predicated region
      $region93: #{tpu_custom_call.1} parent=5 // pred_check
        %p1136 = pneg %p1135
      $region94: #{tpu_custom_call.1} parent=5 // pred_check_branch
        %1138 = sbr.rel (%p1136) target = $region96
      $region95: #{tpu_custom_call.1} parent=5 // pred_region
        %s1139 = ssub.s32 %s27, 2
        // Predicated region
        $region97: #{tpu_custom_call.1} parent=95 // pred_check
          %p1140 = pneg %p266
        $region98: #{tpu_custom_call.1} parent=95 // pred_check_branch
          %1142 = sbr.rel (%p1140) target = $region100
        $region99: #{tpu_custom_call.1} parent=95 // pred_region
          %s1143 = smul.u32 4, %s39
          %p1144 = scmp.lt.s32.totalorder %s38, 1
          %s1145 = scalar_select %p1144, %s38, 1
          %p1146 = scmp.lt.s32.totalorder %s1143, 3
          %s1147 = scalar_select %p1146, %s1143, 3
          %s1148 = smul.addr %s1145, 8
          %s1149 = sadd.s32 %s1147, %s1148
          %s1150 = smul.addr %s1149, 4
          %s1151 = scalar_lea.vmem %s8, %s1150
        $region100: #{tpu_custom_call.1} parent=95 // pred_fallthru
          _
        // Predicated region
        $region101: #{tpu_custom_call.1} parent=95 // pred_check
          %p1152 = pneg %p294
        $region102: #{tpu_custom_call.1} parent=95 // pred_check_branch
          %1154 = sbr.rel (%p1152) target = $region104
        $region103: #{tpu_custom_call.1} parent=95 // pred_region
          %s1155 = smul.u32 4, %s39
          %p1156 = scmp.lt.s32.totalorder %s38, 1
          %s1157 = scalar_select %p1156, %s38, 1
          %p1158 = scmp.lt.s32.totalorder %s1155, 3
          %s1159 = scalar_select %p1158, %s1155, 3
          %s1160 = smul.addr %s1157, 8
          %s1161 = sadd.s32 %s1159, %s1160
          %s1162 = smul.addr %s1161, 4
          %s1163 = scalar_lea.vmem %s9, %s1162
        $region104: #{tpu_custom_call.1} parent=95 // pred_fallthru
          _
        // Predicated region
        $region105: #{tpu_custom_call.1} parent=95 // pred_check
          %p1164 = pneg %p322
        $region106: #{tpu_custom_call.1} parent=95 // pred_check_branch
          %1166 = sbr.rel (%p1164) target = $region108
        $region107: #{tpu_custom_call.1} parent=95 // pred_region
          %s1167 = smul.u32 4, %s39
          %p1168 = scmp.lt.s32.totalorder %s38, 1
          %s1169 = scalar_select %p1168, %s38, 1
          %p1170 = scmp.lt.s32.totalorder %s1167, 3
          %s1171 = scalar_select %p1170, %s1167, 3
          %s1172 = smul.addr %s1169, 8
          %s1173 = sadd.s32 %s1171, %s1172
          %s1174 = smul.addr %s1173, 4
          %s1175 = scalar_lea.vmem %s10, %s1174
        $region108: #{tpu_custom_call.1} parent=95 // pred_fallthru
          _
      $region96: #{tpu_custom_call.1} parent=5 // pred_fallthru
        _
    $region6: #{tpu_custom_call.1} parent=1 // loop_footer
      %s31 = sadd.s32 1, %s27
    $region7: #{tpu_custom_call.1} parent=1 // loop_footer_branch
      %26 = sbr.rel target = $region3
    $region8: #{tpu_custom_call.1} parent=1 // loop_exit
      _
    %1176 = vsyncpa [#allocation3], 1
    %s1177 = scalar_lea.sflag [#allocation3], 1
    %1178 = vsyncpa %s1177, 1
    %1179 = vsyncpa [#allocation5], 1
    %s1180 = scalar_lea.sflag [#allocation5], 1
    %1181 = vsyncpa %s1180, 1
    %1182 = vsyncpa [#allocation8], 1
    %s1183 = scalar_lea.sflag [#allocation8], 1
    %1184 = vsyncpa %s1183, 1
    %1185 = vsyncpa [#allocation11], 1

</llo_original>
